<compile_context>
chip_gen: v5e
topology: v5e:2x2
jax: 0.10.0
libtpu: 0.0.40
codegen_flags: <defaults>
</compile_context>

<pallas_src>
import jax
import jax.numpy as jnp
from jax.experimental import pallas as pl
from jax.experimental.pallas import tpu as pltpu

H = 64            # LSTM hidden size (from the torch module)
G = 4 * H         # packed gate width: [i | f | o | g] = 256 lanes


def lstm_kernel(x_ref, wih_ref, whh_ref, b_ref, wout_ref, bout_ref, y_ref,
                h_scr, c_scr, h_all):
    """One grid step = one (batch tile, time chunk) of the LSTM recurrence + head.

    x_ref   : (TB, BB, I)  raw input, time-major
    wih_ref : (I, G) bf16  input->gates weights, gate order [i|f|o|g]
    whh_ref : (H, G) bf16  hidden->gates weights
    b_ref   : (1, G) f32   b_ih + b_hh (packed gate order)
    wout_ref: (1, H) f32   output Linear weight row
    bout_ref: (1,)   SMEM  output Linear bias (scalar)
    y_ref   : (BB, TB) f32 per-timestep outputs, lane-dense over time
    h_scr   : (BB, H) f32  hidden state carried across time chunks (VMEM scratch)
    c_scr   : (BB, H) f32  cell state carried across time chunks (VMEM scratch)
    h_all   : (TB, BB, H)  hidden states of this chunk (for the fused head)
    """
    TB = x_ref.shape[0]
    BB = h_scr.shape[0]

    @pl.when(pl.program_id(1) == 0)           # start of the sequence for this batch tile
    def _():
        h_scr[...] = jnp.zeros_like(h_scr)
        c_scr[...] = jnp.zeros_like(c_scr)

    # Resident bf16 weights; hoisted out of the loop so the recurrent RHS is
    # effectively weight-stationary (see TODO above).
    wih = wih_ref[...]                                     # (I, G) bf16
    whh = whh_ref[...]                                     # (H, G) bf16
    bias = jnp.broadcast_to(b_ref[...], (BB, G))           # hoisted broadcast, f32

    def step(t, carry):
        h, c = carry                                       # f32 (BB, H)
        # Input projection: independent of h -> off the serial critical path.
        xg = jnp.dot(x_ref[t].astype(jnp.bfloat16), wih,
                     preferred_element_type=jnp.float32)
        # Serial path: a single (BB,64)x(64,256) bf16 MXU dot per step.
        hg = jnp.dot(h.astype(jnp.bfloat16), whh,
                     preferred_element_type=jnp.float32)
        gates = xg + hg + bias                             # (BB, G) f32
        # Packed gate order [i | f | o | g]: one sigmoid pass covers i, f, o.
        sig = jax.nn.sigmoid(gates[:, :3 * H])
        i_g = sig[:, 0 * H:1 * H]
        f_g = sig[:, 1 * H:2 * H]
        o_g = sig[:, 2 * H:3 * H]
        g_g = jnp.tanh(gates[:, 3 * H:4 * H])
        c_new = f_g * c + i_g * g_g                        # f32 state update
        h_new = o_g * jnp.tanh(c_new)
        h_all[t] = h_new                                   # VMEM scratch store only
        return (h_new, c_new)

    # Bound vreg pressure at large batch tiles (live gates tile is ~BB/4 vregs).
    unroll = True if TB <= 8 else (8 if BB <= 32 else 4)
    h_fin, c_fin = jax.lax.fori_loop(0, TB, step, (h_scr[...], c_scr[...]),
                                     unroll=unroll)
    h_scr[...] = h_fin
    c_scr[...] = c_fin

    # Fused output head Linear(64 -> 1) over the whole chunk: elementwise mul +
    # lane reduction -> (TB, BB), then an EXACT identity NT-dot on the MXU flips
    # it to the lane-dense (BB, TB) output layout (time on lanes).
    w_row = wout_ref[...]                                  # (1, H) f32
    y_tb = jnp.sum(h_all[...] * w_row[None], axis=-1)      # (TB, BB) f32
    rows = jax.lax.broadcasted_iota(jnp.int32, (BB, BB), 0)
    cols = jax.lax.broadcasted_iota(jnp.int32, (BB, BB), 1)
    eye = (rows == cols).astype(jnp.float32)
    y_bt = jax.lax.dot_general(eye, y_tb, (((1,), (1,)), ((), ())),
                               preferred_element_type=jnp.float32)   # (BB, TB)
    y_ref[...] = y_bt + bout_ref[0]


def rnn_forward(x, params, *, time_block=None, batch_block=None):
    """x: (B, T, I) float32 -> (B, T, 1) float32, matching the torch module."""
    wih_p, whh_p, b_p, wout_p, bout = params
    B, T, I = x.shape

    # Finite time chunk so the next x block / y writeback pipeline under the loop.
    if time_block is not None:
        TB = time_block
    elif T % 256 == 0:
        TB = 256
    elif T % 128 == 0:
        TB = 128
    else:
        TB = T
    assert T % TB == 0, "sequence length must be divisible by the time block"

    # Batch tile: bounds vreg pressure and enables the dual-TC split on v7x.
    if batch_block is not None:
        BB = batch_block
    elif B > 64 and B % 64 == 0:
        BB = 64
    else:
        BB = B
    assert B % BB == 0 and (BB == B or BB % 8 == 0)

    n_b, n_t = B // BB, T // TB

    # Stream raw x time-major (I lanes) instead of a precomputed (T,B,4H) f32
    # gate slab: ~32x less HBM traffic for this module (I=16).
    x_tm = jnp.transpose(x, (1, 0, 2))                     # (T, B, I)

    y_bt = pl.pallas_call(
        lstm_kernel,
        out_shape=jax.ShapeDtypeStruct((B, T), jnp.float32),
        grid=(n_b, n_t),
        in_specs=[
            pl.BlockSpec((TB, BB, I), lambda b, s: (s, b, 0)),    # x chunk
            pl.BlockSpec((I, G), lambda b, s: (0, 0)),            # W_ih (resident)
            pl.BlockSpec((H, G), lambda b, s: (0, 0)),            # W_hh (resident)
            pl.BlockSpec((1, G), lambda b, s: (0, 0)),            # gate bias
            pl.BlockSpec((1, H), lambda b, s: (0, 0)),            # W_out row
            pl.BlockSpec(memory_space=pltpu.MemorySpace.SMEM),    # b_out scalar
        ],
        out_specs=pl.BlockSpec((BB, TB), lambda b, s: (b, s)),    # lane-dense (B, T)
        scratch_shapes=[
            pltpu.VMEM((BB, H), jnp.float32),      # h state (persists across time chunks)
            pltpu.VMEM((BB, H), jnp.float32),      # c state
            pltpu.VMEM((TB, BB, H), jnp.float32),  # per-chunk hidden states
        ],
        compiler_params=pltpu.CompilerParams(
            # Batch tiles are independent ("parallel" -> megacore / dual-TC);
            # time must stay sequential ("arbitrary") for the h/c carry.
            dimension_semantics=("parallel", "arbitrary"),
            vmem_limit_bytes=48 * 1024 * 1024,     # fits v7x's 64 MiB physical VMEM
        ),
    )(x_tm, wih_p, whh_p, b_p, wout_p, bout)

    return y_bt[:, :, None]                                 # (B, T, 1)


def _reorder_gates(w4h):
    """torch gate order [i, f, g, o] along dim 0 -> packed order [i, f, o, g]."""
    parts = w4h.reshape(4, H, *w4h.shape[1:])
    return jnp.concatenate([parts[0], parts[1], parts[3], parts[2]], axis=0)


def pack_params(w_ih, w_hh, b_ih, b_hh, w_out, b_out, input_size, hidden=H):
    """Repack torch-layout LSTM/Linear params into the packed-gate kernel layout."""
    del input_size, hidden  # shapes are implied by the tensors themselves
    wih_p = _reorder_gates(w_ih).T.astype(jnp.bfloat16)          # (I, 4H) bf16
    whh_p = _reorder_gates(w_hh).T.astype(jnp.bfloat16)          # (H, 4H) bf16
    b_p = _reorder_gates(b_ih + b_hh).reshape(1, G).astype(jnp.float32)   # (1, 4H)
    wout_p = w_out.reshape(1, H).astype(jnp.float32)             # (1, H)
    bout = b_out.reshape(1).astype(jnp.float32)                  # (1,) scalar in SMEM
    return (wih_p, whh_p, b_p, wout_p, bout)


def rnn_reference(x, w_ih, w_hh, b_ih, b_hh, w_out, b_out):
    """Pure-JAX per-step LSTM + Linear reference using raw torch-layout f32 weights."""
    B, T, I = x.shape
    wih_t, whh_t = w_ih.T, w_hh.T
    b = (b_ih + b_hh)[None, :]

    def step(carry, x_t):
        h, c = carry
        gates = x_t @ wih_t + h @ whh_t + b
        i_g = jax.nn.sigmoid(gates[:, 0 * H:1 * H])
        f_g = jax.nn.sigmoid(gates[:, 1 * H:2 * H])
        g_g = jnp.tanh(gates[:, 2 * H:3 * H])
        o_g = jax.nn.sigmoid(gates[:, 3 * H:4 * H])
        c = f_g * c + i_g * g_g
        h = o_g * jnp.tanh(c)
        y = h @ w_out.T + b_out
        return (h, c), y

    h0 = jnp.zeros((B, H), jnp.float32)
    c0 = jnp.zeros((B, H), jnp.float32)
    _, ys = jax.lax.scan(step, (h0, c0), jnp.transpose(x, (1, 0, 2)))
    return jnp.transpose(ys, (1, 0, 2))


if __name__ == "__main__":
    key = jax.random.PRNGKey(0)
    k_x, k0, k1, k2, k3, k4, k5 = jax.random.split(key, 7)

    B, T, I = 2, 8, 16  # batch=2, seq=8, input_size=16
    x = jax.random.normal(k_x, (B, T, I), jnp.float32)

    # PyTorch default init U(-1/sqrt(H), 1/sqrt(H)), torch tensor layouts.
    bound = float(H) ** -0.5
    w_ih = jax.random.uniform(k0, (4 * H, I), jnp.float32, -bound, bound)
    w_hh = jax.random.uniform(k1, (4 * H, H), jnp.float32, -bound, bound)
    b_ih = jax.random.uniform(k2, (4 * H,), jnp.float32, -bound, bound)
    b_hh = jax.random.uniform(k3, (4 * H,), jnp.float32, -bound, bound)
    w_out = jax.random.uniform(k4, (1, H), jnp.float32, -bound, bound)
    b_out = jax.random.uniform(k5, (1,), jnp.float32, -bound, bound)

    params = pack_params(w_ih, w_hh, b_ih, b_hh, w_out, b_out, I)

    y = jax.block_until_ready(rnn_forward(x, params))
    y_ref = jax.block_until_ready(
        rnn_reference(x, w_ih, w_hh, b_ih, b_hh, w_out, b_out))

    assert y.shape == (B, T, 1)
    # bf16 matmul operands on the recurrent path -> relaxed tolerance vs the f32 reference.
    assert jnp.allclose(y, y_ref, atol=2e-2, rtol=2e-2), "mismatch vs JAX reference"

    print("KERNEL_OK")
</pallas_src>

<mosaic_0001>
module attributes {stable_mosaic.version = 11 : i64} {
  func.func @lstm_kernel(%arg0: i32, %arg1: i32, %arg2: memref<8x2x16xf32, #tpu.memory_space<vmem>>, %arg3: memref<16x256xbf16, #tpu.memory_space<vmem>>, %arg4: memref<64x256xbf16, #tpu.memory_space<vmem>>, %arg5: memref<1x256xf32, #tpu.memory_space<vmem>>, %arg6: memref<1x64xf32, #tpu.memory_space<vmem>>, %arg7: memref<1xf32, #tpu.memory_space<smem>>, %arg8: memref<2x8xf32, #tpu.memory_space<vmem>>, %arg9: memref<2x64xf32, #tpu.memory_space<vmem>>, %arg10: memref<2x64xf32, #tpu.memory_space<vmem>>, %arg11: memref<8x2x64xf32, #tpu.memory_space<vmem>>) attributes {dimension_semantics = [#tpu.dimension_semantics<parallel>, #tpu.dimension_semantics<arbitrary>], iteration_bounds = array<i64: 1, 1>, scalar_prefetch = 0 : i64, scratch_operands = 3 : i64, tpu.core_type = #tpu.core_type<tc>, window_params = [{transform_indices = @transform_0, window_bounds = array<i64: 8, 2, 16>}, {pipeline_mode = #tpu.pipeline_mode<synchronous>, transform_indices = @transform_1, window_bounds = array<i64: 16, 256>}, {pipeline_mode = #tpu.pipeline_mode<synchronous>, transform_indices = @transform_2, window_bounds = array<i64: 64, 256>}, {pipeline_mode = #tpu.pipeline_mode<synchronous>, transform_indices = @transform_3, window_bounds = array<i64: 1, 256>}, {pipeline_mode = #tpu.pipeline_mode<synchronous>, transform_indices = @transform_4, window_bounds = array<i64: 1, 64>}, {transform_indices = @transform_5, window_bounds = array<i64: 1>}, {transform_indices = @transform_6, window_bounds = array<i64: 2, 8>}]} {
    %c0_i32 = arith.constant 0 : i32
    %0 = arith.cmpi eq, %arg1, %c0_i32 : i32
    %1 = arith.extui %0 : i1 to i32
    %c0_i32_0 = arith.constant 0 : i32
    %2 = arith.cmpi ne, %1, %c0_i32_0 : i32
    scf.if %2 {
      %cst_80 = arith.constant 0.000000e+00 : f32
      %260 = vector.broadcast %cst_80 : f32 to vector<2x64xf32>
      %c0_81 = arith.constant 0 : index
      %c0_82 = arith.constant 0 : index
      %261 = vector.load %arg9[%c0_81, %c0_82] : memref<2x64xf32, #tpu.memory_space<vmem>>, vector<2x64xf32>
      tpu.vector_store %arg9[%c0_81, %c0_82], %260 {strides = array<i32>} : memref<2x64xf32, #tpu.memory_space<vmem>>, vector<2x64xf32>,
      %cst_83 = arith.constant 0.000000e+00 : f32
      %262 = vector.broadcast %cst_83 : f32 to vector<2x64xf32>
      %c0_84 = arith.constant 0 : index
      %c0_85 = arith.constant 0 : index
      %263 = vector.load %arg10[%c0_84, %c0_85] : memref<2x64xf32, #tpu.memory_space<vmem>>, vector<2x64xf32>
      tpu.vector_store %arg10[%c0_84, %c0_85], %262 {strides = array<i32>} : memref<2x64xf32, #tpu.memory_space<vmem>>, vector<2x64xf32>,
    } else {
    }
    %c0 = arith.constant 0 : index
    %c0_1 = arith.constant 0 : index
    %3 = vector.load %arg3[%c0, %c0_1] : memref<16x256xbf16, #tpu.memory_space<vmem>>, vector<16x256xbf16>
    %c0_2 = arith.constant 0 : index
    %c0_3 = arith.constant 0 : index
    %4 = vector.load %arg4[%c0_2, %c0_3] : memref<64x256xbf16, #tpu.memory_space<vmem>>, vector<64x256xbf16>
    %c0_4 = arith.constant 0 : index
    %c0_5 = arith.constant 0 : index
    %5 = vector.load %arg5[%c0_4, %c0_5] : memref<1x256xf32, #tpu.memory_space<vmem>>, vector<1x256xf32>
    %6 = vector.shape_cast %5 : vector<1x256xf32> to vector<1x256xf32>
    %7 = vector.broadcast %6 : vector<1x256xf32> to vector<2x256xf32>
    %c0_6 = arith.constant 0 : index
    %c0_7 = arith.constant 0 : index
    %8 = vector.load %arg9[%c0_6, %c0_7] : memref<2x64xf32, #tpu.memory_space<vmem>>, vector<2x64xf32>
    %c0_8 = arith.constant 0 : index
    %c0_9 = arith.constant 0 : index
    %9 = vector.load %arg10[%c0_8, %c0_9] : memref<2x64xf32, #tpu.memory_space<vmem>>, vector<2x64xf32>
    %c0_i32_10 = arith.constant 0 : i32
    %10 = arith.index_cast %c0_i32_10 : i32 to index
    %c0_11 = arith.constant 0 : index
    %c0_12 = arith.constant 0 : index
    %11 = vector.load %arg2[%10, %c0_11, %c0_12] : memref<8x2x16xf32, #tpu.memory_space<vmem>>, vector<1x2x16xf32>
    %12 = vector.shape_cast %11 : vector<1x2x16xf32> to vector<2x16xf32>
    %13 = arith.truncf %12 : vector<2x16xf32> to vector<2x16xbf16>
    %cst = arith.constant dense<0.000000e+00> : vector<2x256xf32>
    %14 = tpu.matmul %13, %3, %cst {dimension_numbers = #tpu.dot_dimension_numbers<[1], [0], [0], [1], [0, 0, 1, 1], [], []>} : vector<2x16xbf16>, vector<16x256xbf16>, vector<2x256xf32> -> vector<2x256xf32>
    %15 = arith.truncf %8 : vector<2x64xf32> to vector<2x64xbf16>
    %cst_13 = arith.constant dense<0.000000e+00> : vector<2x256xf32>
    %16 = tpu.matmul %15, %4, %cst_13 {dimension_numbers = #tpu.dot_dimension_numbers<[1], [0], [0], [1], [0, 0, 1, 1], [], []>} : vector<2x64xbf16>, vector<64x256xbf16>, vector<2x256xf32> -> vector<2x256xf32>
    %17 = arith.addf %14, %16 : vector<2x256xf32>
    %18 = arith.addf %17, %7 : vector<2x256xf32>
    %19 = vector.extract_strided_slice %18 {offsets = [0, 0], sizes = [2, 192], strides = [1, 1]} : vector<2x256xf32> to vector<2x192xf32>
    %20 = arith.negf %19 : vector<2x192xf32>
    %21 = math.exp %20 : vector<2x192xf32>
    %cst_14 = arith.constant 1.000000e+00 : f32
    %22 = vector.broadcast %cst_14 : f32 to vector<2x192xf32>
    %23 = arith.addf %22, %21 : vector<2x192xf32>
    %24 = arith.divf %22, %23 : vector<2x192xf32>
    %25 = vector.extract_strided_slice %24 {offsets = [0, 0], sizes = [2, 64], strides = [1, 1]} : vector<2x192xf32> to vector<2x64xf32>
    %26 = vector.extract_strided_slice %24 {offsets = [0, 64], sizes = [2, 64], strides = [1, 1]} : vector<2x192xf32> to vector<2x64xf32>
    %27 = vector.extract_strided_slice %24 {offsets = [0, 128], sizes = [2, 64], strides = [1, 1]} : vector<2x192xf32> to vector<2x64xf32>
    %28 = vector.extract_strided_slice %18 {offsets = [0, 192], sizes = [2, 64], strides = [1, 1]} : vector<2x256xf32> to vector<2x64xf32>
    %29 = math.tanh %28 : vector<2x64xf32>
    %30 = arith.mulf %26, %9 : vector<2x64xf32>
    %31 = arith.mulf %25, %29 : vector<2x64xf32>
    %32 = arith.addf %30, %31 : vector<2x64xf32>
    %33 = math.tanh %32 : vector<2x64xf32>
    %34 = arith.mulf %27, %33 : vector<2x64xf32>
    %35 = arith.index_cast %c0_i32_10 : i32 to index
    %c0_15 = arith.constant 0 : index
    %c0_16 = arith.constant 0 : index
    %36 = vector.load %arg11[%35, %c0_15, %c0_16] : memref<8x2x64xf32, #tpu.memory_space<vmem>>, vector<1x2x64xf32>
    %37 = vector.shape_cast %36 : vector<1x2x64xf32> to vector<2x64xf32>
    %38 = vector.shape_cast %34 : vector<2x64xf32> to vector<1x2x64xf32>
    tpu.vector_store %arg11[%35, %c0_15, %c0_16], %38 {strides = array<i32>} : memref<8x2x64xf32, #tpu.memory_space<vmem>>, vector<1x2x64xf32>,
    %c1_i32 = arith.constant 1 : i32
    %39 = arith.index_cast %c1_i32 : i32 to index
    %c0_17 = arith.constant 0 : index
    %c0_18 = arith.constant 0 : index
    %40 = vector.load %arg2[%39, %c0_17, %c0_18] : memref<8x2x16xf32, #tpu.memory_space<vmem>>, vector<1x2x16xf32>
    %41 = vector.shape_cast %40 : vector<1x2x16xf32> to vector<2x16xf32>
    %42 = arith.truncf %41 : vector<2x16xf32> to vector<2x16xbf16>
    %cst_19 = arith.constant dense<0.000000e+00> : vector<2x256xf32>
    %43 = tpu.matmul %42, %3, %cst_19 {dimension_numbers = #tpu.dot_dimension_numbers<[1], [0], [0], [1], [0, 0, 1, 1], [], []>} : vector<2x16xbf16>, vector<16x256xbf16>, vector<2x256xf32> -> vector<2x256xf32>
    %44 = arith.truncf %34 : vector<2x64xf32> to vector<2x64xbf16>
    %cst_20 = arith.constant dense<0.000000e+00> : vector<2x256xf32>
    %45 = tpu.matmul %44, %4, %cst_20 {dimension_numbers = #tpu.dot_dimension_numbers<[1], [0], [0], [1], [0, 0, 1, 1], [], []>} : vector<2x64xbf16>, vector<64x256xbf16>, vector<2x256xf32> -> vector<2x256xf32>
    %46 = arith.addf %43, %45 : vector<2x256xf32>
    %47 = arith.addf %46, %7 : vector<2x256xf32>
    %48 = vector.extract_strided_slice %47 {offsets = [0, 0], sizes = [2, 192], strides = [1, 1]} : vector<2x256xf32> to vector<2x192xf32>
    %49 = arith.negf %48 : vector<2x192xf32>
    %50 = math.exp %49 : vector<2x192xf32>
    %cst_21 = arith.constant 1.000000e+00 : f32
    %51 = vector.broadcast %cst_21 : f32 to vector<2x192xf32>
    %52 = arith.addf %51, %50 : vector<2x192xf32>
    %53 = arith.divf %51, %52 : vector<2x192xf32>
    %54 = vector.extract_strided_slice %53 {offsets = [0, 0], sizes = [2, 64], strides = [1, 1]} : vector<2x192xf32> to vector<2x64xf32>
    %55 = vector.extract_strided_slice %53 {offsets = [0, 64], sizes = [2, 64], strides = [1, 1]} : vector<2x192xf32> to vector<2x64xf32>
    %56 = vector.extract_strided_slice %53 {offsets = [0, 128], sizes = [2, 64], strides = [1, 1]} : vector<2x192xf32> to vector<2x64xf32>
    %57 = vector.extract_strided_slice %47 {offsets = [0, 192], sizes = [2, 64], strides = [1, 1]} : vector<2x256xf32> to vector<2x64xf32>
    %58 = math.tanh %57 : vector<2x64xf32>
    %59 = arith.mulf %55, %32 : vector<2x64xf32>
    %60 = arith.mulf %54, %58 : vector<2x64xf32>
    %61 = arith.addf %59, %60 : vector<2x64xf32>
    %62 = math.tanh %61 : vector<2x64xf32>
    %63 = arith.mulf %56, %62 : vector<2x64xf32>
    %64 = arith.index_cast %c1_i32 : i32 to index
    %c0_22 = arith.constant 0 : index
    %c0_23 = arith.constant 0 : index
    %65 = vector.load %arg11[%64, %c0_22, %c0_23] : memref<8x2x64xf32, #tpu.memory_space<vmem>>, vector<1x2x64xf32>
    %66 = vector.shape_cast %65 : vector<1x2x64xf32> to vector<2x64xf32>
    %67 = vector.shape_cast %63 : vector<2x64xf32> to vector<1x2x64xf32>
    tpu.vector_store %arg11[%64, %c0_22, %c0_23], %67 {strides = array<i32>} : memref<8x2x64xf32, #tpu.memory_space<vmem>>, vector<1x2x64xf32>,
    %c2_i32 = arith.constant 2 : i32
    %68 = arith.index_cast %c2_i32 : i32 to index
    %c0_24 = arith.constant 0 : index
    %c0_25 = arith.constant 0 : index
    %69 = vector.load %arg2[%68, %c0_24, %c0_25] : memref<8x2x16xf32, #tpu.memory_space<vmem>>, vector<1x2x16xf32>
    %70 = vector.shape_cast %69 : vector<1x2x16xf32> to vector<2x16xf32>
    %71 = arith.truncf %70 : vector<2x16xf32> to vector<2x16xbf16>
    %cst_26 = arith.constant dense<0.000000e+00> : vector<2x256xf32>
    %72 = tpu.matmul %71, %3, %cst_26 {dimension_numbers = #tpu.dot_dimension_numbers<[1], [0], [0], [1], [0, 0, 1, 1], [], []>} : vector<2x16xbf16>, vector<16x256xbf16>, vector<2x256xf32> -> vector<2x256xf32>
    %73 = arith.truncf %63 : vector<2x64xf32> to vector<2x64xbf16>
    %cst_27 = arith.constant dense<0.000000e+00> : vector<2x256xf32>
    %74 = tpu.matmul %73, %4, %cst_27 {dimension_numbers = #tpu.dot_dimension_numbers<[1], [0], [0], [1], [0, 0, 1, 1], [], []>} : vector<2x64xbf16>, vector<64x256xbf16>, vector<2x256xf32> -> vector<2x256xf32>
    %75 = arith.addf %72, %74 : vector<2x256xf32>
    %76 = arith.addf %75, %7 : vector<2x256xf32>
    %77 = vector.extract_strided_slice %76 {offsets = [0, 0], sizes = [2, 192], strides = [1, 1]} : vector<2x256xf32> to vector<2x192xf32>
    %78 = arith.negf %77 : vector<2x192xf32>
    %79 = math.exp %78 : vector<2x192xf32>
    %cst_28 = arith.constant 1.000000e+00 : f32
    %80 = vector.broadcast %cst_28 : f32 to vector<2x192xf32>
    %81 = arith.addf %80, %79 : vector<2x192xf32>
    %82 = arith.divf %80, %81 : vector<2x192xf32>
    %83 = vector.extract_strided_slice %82 {offsets = [0, 0], sizes = [2, 64], strides = [1, 1]} : vector<2x192xf32> to vector<2x64xf32>
    %84 = vector.extract_strided_slice %82 {offsets = [0, 64], sizes = [2, 64], strides = [1, 1]} : vector<2x192xf32> to vector<2x64xf32>
    %85 = vector.extract_strided_slice %82 {offsets = [0, 128], sizes = [2, 64], strides = [1, 1]} : vector<2x192xf32> to vector<2x64xf32>
    %86 = vector.extract_strided_slice %76 {offsets = [0, 192], sizes = [2, 64], strides = [1, 1]} : vector<2x256xf32> to vector<2x64xf32>
    %87 = math.tanh %86 : vector<2x64xf32>
    %88 = arith.mulf %84, %61 : vector<2x64xf32>
    %89 = arith.mulf %83, %87 : vector<2x64xf32>
    %90 = arith.addf %88, %89 : vector<2x64xf32>
    %91 = math.tanh %90 : vector<2x64xf32>
    %92 = arith.mulf %85, %91 : vector<2x64xf32>
    %93 = arith.index_cast %c2_i32 : i32 to index
    %c0_29 = arith.constant 0 : index
    %c0_30 = arith.constant 0 : index
    %94 = vector.load %arg11[%93, %c0_29, %c0_30] : memref<8x2x64xf32, #tpu.memory_space<vmem>>, vector<1x2x64xf32>
    %95 = vector.shape_cast %94 : vector<1x2x64xf32> to vector<2x64xf32>
    %96 = vector.shape_cast %92 : vector<2x64xf32> to vector<1x2x64xf32>
    tpu.vector_store %arg11[%93, %c0_29, %c0_30], %96 {strides = array<i32>} : memref<8x2x64xf32, #tpu.memory_space<vmem>>, vector<1x2x64xf32>,
    %c3_i32 = arith.constant 3 : i32
    %97 = arith.index_cast %c3_i32 : i32 to index
    %c0_31 = arith.constant 0 : index
    %c0_32 = arith.constant 0 : index
    %98 = vector.load %arg2[%97, %c0_31, %c0_32] : memref<8x2x16xf32, #tpu.memory_space<vmem>>, vector<1x2x16xf32>
    %99 = vector.shape_cast %98 : vector<1x2x16xf32> to vector<2x16xf32>
    %100 = arith.truncf %99 : vector<2x16xf32> to vector<2x16xbf16>
    %cst_33 = arith.constant dense<0.000000e+00> : vector<2x256xf32>
    %101 = tpu.matmul %100, %3, %cst_33 {dimension_numbers = #tpu.dot_dimension_numbers<[1], [0], [0], [1], [0, 0, 1, 1], [], []>} : vector<2x16xbf16>, vector<16x256xbf16>, vector<2x256xf32> -> vector<2x256xf32>
    %102 = arith.truncf %92 : vector<2x64xf32> to vector<2x64xbf16>
    %cst_34 = arith.constant dense<0.000000e+00> : vector<2x256xf32>
    %103 = tpu.matmul %102, %4, %cst_34 {dimension_numbers = #tpu.dot_dimension_numbers<[1], [0], [0], [1], [0, 0, 1, 1], [], []>} : vector<2x64xbf16>, vector<64x256xbf16>, vector<2x256xf32> -> vector<2x256xf32>
    %104 = arith.addf %101, %103 : vector<2x256xf32>
    %105 = arith.addf %104, %7 : vector<2x256xf32>
    %106 = vector.extract_strided_slice %105 {offsets = [0, 0], sizes = [2, 192], strides = [1, 1]} : vector<2x256xf32> to vector<2x192xf32>
    %107 = arith.negf %106 : vector<2x192xf32>
    %108 = math.exp %107 : vector<2x192xf32>
    %cst_35 = arith.constant 1.000000e+00 : f32
    %109 = vector.broadcast %cst_35 : f32 to vector<2x192xf32>
    %110 = arith.addf %109, %108 : vector<2x192xf32>
    %111 = arith.divf %109, %110 : vector<2x192xf32>
    %112 = vector.extract_strided_slice %111 {offsets = [0, 0], sizes = [2, 64], strides = [1, 1]} : vector<2x192xf32> to vector<2x64xf32>
    %113 = vector.extract_strided_slice %111 {offsets = [0, 64], sizes = [2, 64], strides = [1, 1]} : vector<2x192xf32> to vector<2x64xf32>
    %114 = vector.extract_strided_slice %111 {offsets = [0, 128], sizes = [2, 64], strides = [1, 1]} : vector<2x192xf32> to vector<2x64xf32>
    %115 = vector.extract_strided_slice %105 {offsets = [0, 192], sizes = [2, 64], strides = [1, 1]} : vector<2x256xf32> to vector<2x64xf32>
    %116 = math.tanh %115 : vector<2x64xf32>
    %117 = arith.mulf %113, %90 : vector<2x64xf32>
    %118 = arith.mulf %112, %116 : vector<2x64xf32>
    %119 = arith.addf %117, %118 : vector<2x64xf32>
    %120 = math.tanh %119 : vector<2x64xf32>
    %121 = arith.mulf %114, %120 : vector<2x64xf32>
    %122 = arith.index_cast %c3_i32 : i32 to index
    %c0_36 = arith.constant 0 : index
    %c0_37 = arith.constant 0 : index
    %123 = vector.load %arg11[%122, %c0_36, %c0_37] : memref<8x2x64xf32, #tpu.memory_space<vmem>>, vector<1x2x64xf32>
    %124 = vector.shape_cast %123 : vector<1x2x64xf32> to vector<2x64xf32>
    %125 = vector.shape_cast %121 : vector<2x64xf32> to vector<1x2x64xf32>
    tpu.vector_store %arg11[%122, %c0_36, %c0_37], %125 {strides = array<i32>} : memref<8x2x64xf32, #tpu.memory_space<vmem>>, vector<1x2x64xf32>,
    %c4_i32 = arith.constant 4 : i32
    %126 = arith.index_cast %c4_i32 : i32 to index
    %c0_38 = arith.constant 0 : index
    %c0_39 = arith.constant 0 : index
    %127 = vector.load %arg2[%126, %c0_38, %c0_39] : memref<8x2x16xf32, #tpu.memory_space<vmem>>, vector<1x2x16xf32>
    %128 = vector.shape_cast %127 : vector<1x2x16xf32> to vector<2x16xf32>
    %129 = arith.truncf %128 : vector<2x16xf32> to vector<2x16xbf16>
    %cst_40 = arith.constant dense<0.000000e+00> : vector<2x256xf32>
    %130 = tpu.matmul %129, %3, %cst_40 {dimension_numbers = #tpu.dot_dimension_numbers<[1], [0], [0], [1], [0, 0, 1, 1], [], []>} : vector<2x16xbf16>, vector<16x256xbf16>, vector<2x256xf32> -> vector<2x256xf32>
    %131 = arith.truncf %121 : vector<2x64xf32> to vector<2x64xbf16>
    %cst_41 = arith.constant dense<0.000000e+00> : vector<2x256xf32>
    %132 = tpu.matmul %131, %4, %cst_41 {dimension_numbers = #tpu.dot_dimension_numbers<[1], [0], [0], [1], [0, 0, 1, 1], [], []>} : vector<2x64xbf16>, vector<64x256xbf16>, vector<2x256xf32> -> vector<2x256xf32>
    %133 = arith.addf %130, %132 : vector<2x256xf32>
    %134 = arith.addf %133, %7 : vector<2x256xf32>
    %135 = vector.extract_strided_slice %134 {offsets = [0, 0], sizes = [2, 192], strides = [1, 1]} : vector<2x256xf32> to vector<2x192xf32>
    %136 = arith.negf %135 : vector<2x192xf32>
    %137 = math.exp %136 : vector<2x192xf32>
    %cst_42 = arith.constant 1.000000e+00 : f32
    %138 = vector.broadcast %cst_42 : f32 to vector<2x192xf32>
    %139 = arith.addf %138, %137 : vector<2x192xf32>
    %140 = arith.divf %138, %139 : vector<2x192xf32>
    %141 = vector.extract_strided_slice %140 {offsets = [0, 0], sizes = [2, 64], strides = [1, 1]} : vector<2x192xf32> to vector<2x64xf32>
    %142 = vector.extract_strided_slice %140 {offsets = [0, 64], sizes = [2, 64], strides = [1, 1]} : vector<2x192xf32> to vector<2x64xf32>
    %143 = vector.extract_strided_slice %140 {offsets = [0, 128], sizes = [2, 64], strides = [1, 1]} : vector<2x192xf32> to vector<2x64xf32>
    %144 = vector.extract_strided_slice %134 {offsets = [0, 192], sizes = [2, 64], strides = [1, 1]} : vector<2x256xf32> to vector<2x64xf32>
    %145 = math.tanh %144 : vector<2x64xf32>
    %146 = arith.mulf %142, %119 : vector<2x64xf32>
    %147 = arith.mulf %141, %145 : vector<2x64xf32>
    %148 = arith.addf %146, %147 : vector<2x64xf32>
    %149 = math.tanh %148 : vector<2x64xf32>
    %150 = arith.mulf %143, %149 : vector<2x64xf32>
    %151 = arith.index_cast %c4_i32 : i32 to index
    %c0_43 = arith.constant 0 : index
    %c0_44 = arith.constant 0 : index
    %152 = vector.load %arg11[%151, %c0_43, %c0_44] : memref<8x2x64xf32, #tpu.memory_space<vmem>>, vector<1x2x64xf32>
    %153 = vector.shape_cast %152 : vector<1x2x64xf32> to vector<2x64xf32>
    %154 = vector.shape_cast %150 : vector<2x64xf32> to vector<1x2x64xf32>
    tpu.vector_store %arg11[%151, %c0_43, %c0_44], %154 {strides = array<i32>} : memref<8x2x64xf32, #tpu.memory_space<vmem>>, vector<1x2x64xf32>,
    %c5_i32 = arith.constant 5 : i32
    %155 = arith.index_cast %c5_i32 : i32 to index
    %c0_45 = arith.constant 0 : index
    %c0_46 = arith.constant 0 : index
    %156 = vector.load %arg2[%155, %c0_45, %c0_46] : memref<8x2x16xf32, #tpu.memory_space<vmem>>, vector<1x2x16xf32>
    %157 = vector.shape_cast %156 : vector<1x2x16xf32> to vector<2x16xf32>
    %158 = arith.truncf %157 : vector<2x16xf32> to vector<2x16xbf16>
    %cst_47 = arith.constant dense<0.000000e+00> : vector<2x256xf32>
    %159 = tpu.matmul %158, %3, %cst_47 {dimension_numbers = #tpu.dot_dimension_numbers<[1], [0], [0], [1], [0, 0, 1, 1], [], []>} : vector<2x16xbf16>, vector<16x256xbf16>, vector<2x256xf32> -> vector<2x256xf32>
    %160 = arith.truncf %150 : vector<2x64xf32> to vector<2x64xbf16>
    %cst_48 = arith.constant dense<0.000000e+00> : vector<2x256xf32>
    %161 = tpu.matmul %160, %4, %cst_48 {dimension_numbers = #tpu.dot_dimension_numbers<[1], [0], [0], [1], [0, 0, 1, 1], [], []>} : vector<2x64xbf16>, vector<64x256xbf16>, vector<2x256xf32> -> vector<2x256xf32>
    %162 = arith.addf %159, %161 : vector<2x256xf32>
    %163 = arith.addf %162, %7 : vector<2x256xf32>
    %164 = vector.extract_strided_slice %163 {offsets = [0, 0], sizes = [2, 192], strides = [1, 1]} : vector<2x256xf32> to vector<2x192xf32>
    %165 = arith.negf %164 : vector<2x192xf32>
    %166 = math.exp %165 : vector<2x192xf32>
    %cst_49 = arith.constant 1.000000e+00 : f32
    %167 = vector.broadcast %cst_49 : f32 to vector<2x192xf32>
    %168 = arith.addf %167, %166 : vector<2x192xf32>
    %169 = arith.divf %167, %168 : vector<2x192xf32>
    %170 = vector.extract_strided_slice %169 {offsets = [0, 0], sizes = [2, 64], strides = [1, 1]} : vector<2x192xf32> to vector<2x64xf32>
    %171 = vector.extract_strided_slice %169 {offsets = [0, 64], sizes = [2, 64], strides = [1, 1]} : vector<2x192xf32> to vector<2x64xf32>
    %172 = vector.extract_strided_slice %169 {offsets = [0, 128], sizes = [2, 64], strides = [1, 1]} : vector<2x192xf32> to vector<2x64xf32>
    %173 = vector.extract_strided_slice %163 {offsets = [0, 192], sizes = [2, 64], strides = [1, 1]} : vector<2x256xf32> to vector<2x64xf32>
    %174 = math.tanh %173 : vector<2x64xf32>
    %175 = arith.mulf %171, %148 : vector<2x64xf32>
    %176 = arith.mulf %170, %174 : vector<2x64xf32>
    %177 = arith.addf %175, %176 : vector<2x64xf32>
    %178 = math.tanh %177 : vector<2x64xf32>
    %179 = arith.mulf %172, %178 : vector<2x64xf32>
    %180 = arith.index_cast %c5_i32 : i32 to index
    %c0_50 = arith.constant 0 : index
    %c0_51 = arith.constant 0 : index
    %181 = vector.load %arg11[%180, %c0_50, %c0_51] : memref<8x2x64xf32, #tpu.memory_space<vmem>>, vector<1x2x64xf32>
    %182 = vector.shape_cast %181 : vector<1x2x64xf32> to vector<2x64xf32>
    %183 = vector.shape_cast %179 : vector<2x64xf32> to vector<1x2x64xf32>
    tpu.vector_store %arg11[%180, %c0_50, %c0_51], %183 {strides = array<i32>} : memref<8x2x64xf32, #tpu.memory_space<vmem>>, vector<1x2x64xf32>,
    %c6_i32 = arith.constant 6 : i32
    %184 = arith.index_cast %c6_i32 : i32 to index
    %c0_52 = arith.constant 0 : index
    %c0_53 = arith.constant 0 : index
    %185 = vector.load %arg2[%184, %c0_52, %c0_53] : memref<8x2x16xf32, #tpu.memory_space<vmem>>, vector<1x2x16xf32>
    %186 = vector.shape_cast %185 : vector<1x2x16xf32> to vector<2x16xf32>
    %187 = arith.truncf %186 : vector<2x16xf32> to vector<2x16xbf16>
    %cst_54 = arith.constant dense<0.000000e+00> : vector<2x256xf32>
    %188 = tpu.matmul %187, %3, %cst_54 {dimension_numbers = #tpu.dot_dimension_numbers<[1], [0], [0], [1], [0, 0, 1, 1], [], []>} : vector<2x16xbf16>, vector<16x256xbf16>, vector<2x256xf32> -> vector<2x256xf32>
    %189 = arith.truncf %179 : vector<2x64xf32> to vector<2x64xbf16>
    %cst_55 = arith.constant dense<0.000000e+00> : vector<2x256xf32>
    %190 = tpu.matmul %189, %4, %cst_55 {dimension_numbers = #tpu.dot_dimension_numbers<[1], [0], [0], [1], [0, 0, 1, 1], [], []>} : vector<2x64xbf16>, vector<64x256xbf16>, vector<2x256xf32> -> vector<2x256xf32>
    %191 = arith.addf %188, %190 : vector<2x256xf32>
    %192 = arith.addf %191, %7 : vector<2x256xf32>
    %193 = vector.extract_strided_slice %192 {offsets = [0, 0], sizes = [2, 192], strides = [1, 1]} : vector<2x256xf32> to vector<2x192xf32>
    %194 = arith.negf %193 : vector<2x192xf32>
    %195 = math.exp %194 : vector<2x192xf32>
    %cst_56 = arith.constant 1.000000e+00 : f32
    %196 = vector.broadcast %cst_56 : f32 to vector<2x192xf32>
    %197 = arith.addf %196, %195 : vector<2x192xf32>
    %198 = arith.divf %196, %197 : vector<2x192xf32>
    %199 = vector.extract_strided_slice %198 {offsets = [0, 0], sizes = [2, 64], strides = [1, 1]} : vector<2x192xf32> to vector<2x64xf32>
    %200 = vector.extract_strided_slice %198 {offsets = [0, 64], sizes = [2, 64], strides = [1, 1]} : vector<2x192xf32> to vector<2x64xf32>
    %201 = vector.extract_strided_slice %198 {offsets = [0, 128], sizes = [2, 64], strides = [1, 1]} : vector<2x192xf32> to vector<2x64xf32>
    %202 = vector.extract_strided_slice %192 {offsets = [0, 192], sizes = [2, 64], strides = [1, 1]} : vector<2x256xf32> to vector<2x64xf32>
    %203 = math.tanh %202 : vector<2x64xf32>
    %204 = arith.mulf %200, %177 : vector<2x64xf32>
    %205 = arith.mulf %199, %203 : vector<2x64xf32>
    %206 = arith.addf %204, %205 : vector<2x64xf32>
    %207 = math.tanh %206 : vector<2x64xf32>
    %208 = arith.mulf %201, %207 : vector<2x64xf32>
    %209 = arith.index_cast %c6_i32 : i32 to index
    %c0_57 = arith.constant 0 : index
    %c0_58 = arith.constant 0 : index
    %210 = vector.load %arg11[%209, %c0_57, %c0_58] : memref<8x2x64xf32, #tpu.memory_space<vmem>>, vector<1x2x64xf32>
    %211 = vector.shape_cast %210 : vector<1x2x64xf32> to vector<2x64xf32>
    %212 = vector.shape_cast %208 : vector<2x64xf32> to vector<1x2x64xf32>
    tpu.vector_store %arg11[%209, %c0_57, %c0_58], %212 {strides = array<i32>} : memref<8x2x64xf32, #tpu.memory_space<vmem>>, vector<1x2x64xf32>,
    %c7_i32 = arith.constant 7 : i32
    %213 = arith.index_cast %c7_i32 : i32 to index
    %c0_59 = arith.constant 0 : index
    %c0_60 = arith.constant 0 : index
    %214 = vector.load %arg2[%213, %c0_59, %c0_60] : memref<8x2x16xf32, #tpu.memory_space<vmem>>, vector<1x2x16xf32>
    %215 = vector.shape_cast %214 : vector<1x2x16xf32> to vector<2x16xf32>
    %216 = arith.truncf %215 : vector<2x16xf32> to vector<2x16xbf16>
    %cst_61 = arith.constant dense<0.000000e+00> : vector<2x256xf32>
    %217 = tpu.matmul %216, %3, %cst_61 {dimension_numbers = #tpu.dot_dimension_numbers<[1], [0], [0], [1], [0, 0, 1, 1], [], []>} : vector<2x16xbf16>, vector<16x256xbf16>, vector<2x256xf32> -> vector<2x256xf32>
    %218 = arith.truncf %208 : vector<2x64xf32> to vector<2x64xbf16>
    %cst_62 = arith.constant dense<0.000000e+00> : vector<2x256xf32>
    %219 = tpu.matmul %218, %4, %cst_62 {dimension_numbers = #tpu.dot_dimension_numbers<[1], [0], [0], [1], [0, 0, 1, 1], [], []>} : vector<2x64xbf16>, vector<64x256xbf16>, vector<2x256xf32> -> vector<2x256xf32>
    %220 = arith.addf %217, %219 : vector<2x256xf32>
    %221 = arith.addf %220, %7 : vector<2x256xf32>
    %222 = vector.extract_strided_slice %221 {offsets = [0, 0], sizes = [2, 192], strides = [1, 1]} : vector<2x256xf32> to vector<2x192xf32>
    %223 = arith.negf %222 : vector<2x192xf32>
    %224 = math.exp %223 : vector<2x192xf32>
    %cst_63 = arith.constant 1.000000e+00 : f32
    %225 = vector.broadcast %cst_63 : f32 to vector<2x192xf32>
    %226 = arith.addf %225, %224 : vector<2x192xf32>
    %227 = arith.divf %225, %226 : vector<2x192xf32>
    %228 = vector.extract_strided_slice %227 {offsets = [0, 0], sizes = [2, 64], strides = [1, 1]} : vector<2x192xf32> to vector<2x64xf32>
    %229 = vector.extract_strided_slice %227 {offsets = [0, 64], sizes = [2, 64], strides = [1, 1]} : vector<2x192xf32> to vector<2x64xf32>
    %230 = vector.extract_strided_slice %227 {offsets = [0, 128], sizes = [2, 64], strides = [1, 1]} : vector<2x192xf32> to vector<2x64xf32>
    %231 = vector.extract_strided_slice %221 {offsets = [0, 192], sizes = [2, 64], strides = [1, 1]} : vector<2x256xf32> to vector<2x64xf32>
    %232 = math.tanh %231 : vector<2x64xf32>
    %233 = arith.mulf %229, %206 : vector<2x64xf32>
    %234 = arith.mulf %228, %232 : vector<2x64xf32>
    %235 = arith.addf %233, %234 : vector<2x64xf32>
    %236 = math.tanh %235 : vector<2x64xf32>
    %237 = arith.mulf %230, %236 : vector<2x64xf32>
    %238 = arith.index_cast %c7_i32 : i32 to index
    %c0_64 = arith.constant 0 : index
    %c0_65 = arith.constant 0 : index
    %239 = vector.load %arg11[%238, %c0_64, %c0_65] : memref<8x2x64xf32, #tpu.memory_space<vmem>>, vector<1x2x64xf32>
    %240 = vector.shape_cast %239 : vector<1x2x64xf32> to vector<2x64xf32>
    %241 = vector.shape_cast %237 : vector<2x64xf32> to vector<1x2x64xf32>
    tpu.vector_store %arg11[%238, %c0_64, %c0_65], %241 {strides = array<i32>} : memref<8x2x64xf32, #tpu.memory_space<vmem>>, vector<1x2x64xf32>,
    %c8_i32 = arith.constant 8 : i32
    %c0_66 = arith.constant 0 : index
    %c0_67 = arith.constant 0 : index
    %242 = vector.load %arg9[%c0_66, %c0_67] : memref<2x64xf32, #tpu.memory_space<vmem>>, vector<2x64xf32>
    tpu.vector_store %arg9[%c0_66, %c0_67], %237 {strides = array<i32>} : memref<2x64xf32, #tpu.memory_space<vmem>>, vector<2x64xf32>,
    %c0_68 = arith.constant 0 : index
    %c0_69 = arith.constant 0 : index
    %243 = vector.load %arg10[%c0_68, %c0_69] : memref<2x64xf32, #tpu.memory_space<vmem>>, vector<2x64xf32>
    tpu.vector_store %arg10[%c0_68, %c0_69], %235 {strides = array<i32>} : memref<2x64xf32, #tpu.memory_space<vmem>>, vector<2x64xf32>,
    %c0_70 = arith.constant 0 : index
    %c0_71 = arith.constant 0 : index
    %244 = vector.load %arg6[%c0_70, %c0_71] : memref<1x64xf32, #tpu.memory_space<vmem>>, vector<1x64xf32>
    %c0_72 = arith.constant 0 : index
    %c0_73 = arith.constant 0 : index
    %c0_74 = arith.constant 0 : index
    %245 = vector.load %arg11[%c0_72, %c0_73, %c0_74] : memref<8x2x64xf32, #tpu.memory_space<vmem>>, vector<8x2x64xf32>
    %246 = vector.shape_cast %244 : vector<1x64xf32> to vector<1x1x64xf32>
    %247 = vector.broadcast %246 : vector<1x1x64xf32> to vector<8x2x64xf32>
    %248 = arith.mulf %245, %247 : vector<8x2x64xf32>
    %cst_75 = arith.constant dense<0.000000e+00> : vector<8x2xf32>
    %249 = vector.multi_reduction <add>, %248, %cst_75 [2] : vector<8x2x64xf32> to vector<8x2xf32>
    %250 = tpu.iota {dimensions = array<i32: 0>} : vector<2x2xi32>
    %251 = tpu.iota {dimensions = array<i32: 1>} : vector<2x2xi32>
    %252 = arith.cmpi eq, %250, %251 : vector<2x2xi32>
    %253 = arith.extui %252 : vector<2x2xi1> to vector<2x2xi32>
    %254 = arith.sitofp %253 : vector<2x2xi32> to vector<2x2xf32>
    %cst_76 = arith.constant dense<0.000000e+00> : vector<2x8xf32>
    %255 = tpu.matmul %254, %249, %cst_76 {dimension_numbers = #tpu.dot_dimension_numbers<[1], [1], [0], [0], [0, 0, 1, 0], [], []>} : vector<2x2xf32>, vector<8x2xf32>, vector<2x8xf32> -> vector<2x8xf32>
    %c0_77 = arith.constant 0 : index
    %256 = memref.load %arg7[%c0_77] : memref<1xf32, #tpu.memory_space<smem>>
    %257 = vector.broadcast %256 : f32 to vector<2x8xf32>
    %258 = arith.addf %255, %257 : vector<2x8xf32>
    %c0_78 = arith.constant 0 : index
    %c0_79 = arith.constant 0 : index
    %259 = vector.load %arg8[%c0_78, %c0_79] : memref<2x8xf32, #tpu.memory_space<vmem>>, vector<2x8xf32>
    tpu.vector_store %arg8[%c0_78, %c0_79], %258 {strides = array<i32>} : memref<2x8xf32, #tpu.memory_space<vmem>>, vector<2x8xf32>,
    return
  }
  func.func @transform_0(%arg0: i32, %arg1: i32) -> (i32, i32, i32) {
    %c0_i32 = arith.constant 0 : i32
    %c0_i32_0 = arith.constant 0 : i32
    return %arg1, %arg0, %c0_i32 : i32, i32, i32
  }
  func.func @transform_1(%arg0: i32, %arg1: i32) -> (i32, i32) {
    %c0_i32 = arith.constant 0 : i32
    %c0_i32_0 = arith.constant 0 : i32
    %c0_i32_1 = arith.constant 0 : i32
    return %c0_i32, %c0_i32_0 : i32, i32
  }
  func.func @transform_2(%arg0: i32, %arg1: i32) -> (i32, i32) {
    %c0_i32 = arith.constant 0 : i32
    %c0_i32_0 = arith.constant 0 : i32
    %c0_i32_1 = arith.constant 0 : i32
    return %c0_i32, %c0_i32_0 : i32, i32
  }
  func.func @transform_3(%arg0: i32, %arg1: i32) -> (i32, i32) {
    %c0_i32 = arith.constant 0 : i32
    %c0_i32_0 = arith.constant 0 : i32
    %c0_i32_1 = arith.constant 0 : i32
    return %c0_i32, %c0_i32_0 : i32, i32
  }
  func.func @transform_4(%arg0: i32, %arg1: i32) -> (i32, i32) {
    %c0_i32 = arith.constant 0 : i32
    %c0_i32_0 = arith.constant 0 : i32
    %c0_i32_1 = arith.constant 0 : i32
    return %c0_i32, %c0_i32_0 : i32, i32
  }
  func.func @transform_5(%arg0: i32, %arg1: i32) -> i32 {
    %c0_i32 = arith.constant 0 : i32
    %c0_i32_0 = arith.constant 0 : i32
    return %c0_i32 : i32
  }
  func.func @transform_6(%arg0: i32, %arg1: i32) -> (i32, i32) {
    %c0_i32 = arith.constant 0 : i32
    return %arg0, %arg1 : i32, i32
  }
}

</mosaic_0001>

<llo_original>
// kernel: tpu_custom_call.1
$region0: #{tpu_custom_call.1}
  #allocation0 [shape = 'u32[]', space=smem, size = 0x4, offset = 0x4, fixed_abs, tag = 'smem constant byte address 0x4 - core index']
  #allocation1 [shape = 'u32[72,128]{1,0:T(1,128)}', space=vmem, size = 0x9000, scoped, tag = 'internal scratch']
  #allocation2 [shape = 'f32[2,64]{1,0:T(2,128)}', space=vmem, size = 0x400, scoped, tag = 'scratch operand']
  #allocation3 [shape = 'f32[2,64]{1,0:T(2,128)}', space=vmem, size = 0x400, scoped, tag = 'scratch operand']
  #allocation4 [shape = 'f32[8,2,64]{2,1,0:T(2,128)}', space=vmem, size = 0x2000, scoped, tag = 'scratch operand']
  #allocation5 [shape = 'f32[1]{0:T(128)S(6)}', space=smem, size = 0x200, scoped, tag = 'scoped memory for tpu_custom_call.1']
  %s0 = inlined_call_operand.hbm [shape: f32[8,2,16], index: 0, kind: input, shape index: {}]
  %s1 = inlined_call_operand.hbm [shape: bf16[16,256], index: 1, kind: input, shape index: {}]
  %s2 = inlined_call_operand.hbm [shape: bf16[64,256], index: 2, kind: input, shape index: {}]
  %s3 = inlined_call_operand.vmem [shape: f32[1,256], index: 3, kind: input, shape index: {}]
  %s4 = inlined_call_operand.vmem [shape: f32[1,64], index: 4, kind: input, shape index: {}]
  %s5 = inlined_call_operand.<no memory space> [shape: f32[1], index: 5, kind: input, shape index: {}]
  %s6 = inlined_call_operand.hbm [shape: f32[2,8], index: 6, kind: output, shape index: {}]
  %s7 = sld [smem:[#allocation0]]
  $region50: #{tpu_custom_call.1} parent=0
    _
  %s9 = ssub.s32 1, %s7
  %s10 = scalar_select 0, %s9, %s7
  %11 = sst [smem:[#allocation5]] %s5
  $region1: #{tpu_custom_call.1} parent=0
    #allocation6 [shape = 'u8[8192]{0}', space=vmem, size = 0x2000, scoped, tag = 'input window, operand 0, single buffered']
    #allocation7 [shape = 's32[1]{0}', space=sflag, size = 0x4, scoped, tag = 'scoped memory for tpu_custom_call.1']
    #allocation8 [shape = 's32[1]{0}', space=sflag, size = 0x4, scoped, tag = 'scoped memory for tpu_custom_call.1']
    #allocation9 [shape = 'u8[8192]{0}', space=vmem, size = 0x2000, scoped, tag = 'input window, operand 1, single buffered']
    #allocation10 [shape = 's32[1]{0}', space=sflag, size = 0x4, scoped, tag = 'scoped memory for tpu_custom_call.1']
    #allocation11 [shape = 'u8[32768]{0}', space=vmem, size = 0x8000, scoped, tag = 'input window, operand 2, single buffered']
    #allocation12 [shape = 'u8[1024]{0}', space=vmem, size = 0x400, scoped, tag = 'output window, operand 0, single buffered']
    %12 = vsyncpa [#allocation7], 0
    %13 = vsyncpa [#allocation10], 0
    %14 = vsyncpa [#allocation8], 0
    // Predicated region
    $region2: #{tpu_custom_call.1} parent=1 // pred_check
      _
    $region3: #{tpu_custom_call.1} parent=1 // pred_check_branch
      %16 = sbr.rel (0) target = $region5
    $region4: #{tpu_custom_call.1} parent=1 // pred_region
      %18 = vsyncadd [#allocation7], 0
      %s19 = sshll.u32 %s0, 4
      %s20 = int_to_ptr.hbm [resolvable:$true] %s19
      %s21 = sshll.u32 [#allocation6], 4
      %s22 = int_to_ptr.vmem [resolvable:$true] %s21
      %27 = dma.hbm_to_vmem [thread:$0]  %s20, 256, %s22, [#allocation7], 32, 32, 2
    $region5: #{tpu_custom_call.1} parent=1 // pred_fallthru
      _
    // Predicated region
    $region6: #{tpu_custom_call.1} parent=1 // pred_check
      _
    $region7: #{tpu_custom_call.1} parent=1 // pred_check_branch
      %29 = sbr.rel (0) target = $region9
    $region8: #{tpu_custom_call.1} parent=1 // pred_region
      %31 = vsyncadd [#allocation10], 0
      %s32 = sshll.u32 %s1, 4
      %s33 = int_to_ptr.hbm [resolvable:$true] %s32
      %s34 = sshll.u32 [#allocation9], 4
      %s35 = int_to_ptr.vmem [resolvable:$true] %s34
      %40 = dma.hbm_to_vmem [thread:$0]  %s33, 256, %s35, [#allocation10], 128, 128, 8
    $region9: #{tpu_custom_call.1} parent=1 // pred_fallthru
      _
    // Predicated region
    $region10: #{tpu_custom_call.1} parent=1 // pred_check
      _
    $region11: #{tpu_custom_call.1} parent=1 // pred_check_branch
      %42 = sbr.rel (0) target = $region13
    $region12: #{tpu_custom_call.1} parent=1 // pred_region
      %44 = vsyncadd [#allocation10], 0
      %s45 = sshll.u32 %s2, 4
      %s46 = int_to_ptr.hbm [resolvable:$true] %s45
      %s47 = sshll.u32 [#allocation11], 4
      %s48 = int_to_ptr.vmem [resolvable:$true] %s47
      %53 = dma.hbm_to_vmem [thread:$0]  %s46, 1024, %s48, [#allocation10], 128, 128, 8
    $region13: #{tpu_custom_call.1} parent=1 // pred_fallthru
      _
    // Predicated region
    $region14: #{tpu_custom_call.1} parent=1 // pred_check
      _
    $region15: #{tpu_custom_call.1} parent=1 // pred_check_branch
      %55 = sbr.rel (0) target = $region17
    $region16: #{tpu_custom_call.1} parent=1 // pred_region
      _
    $region17: #{tpu_custom_call.1} parent=1 // pred_fallthru
      _
    // Predicated region
    $region18: #{tpu_custom_call.1} parent=1 // pred_check
      _
    $region19: #{tpu_custom_call.1} parent=1 // pred_check_branch
      %57 = sbr.rel (0) target = $region21
    $region20: #{tpu_custom_call.1} parent=1 // pred_region
      _
    $region21: #{tpu_custom_call.1} parent=1 // pred_fallthru
      _
    // Predicated region
    $region22: #{tpu_custom_call.1} parent=1 // pred_check
      _
    $region23: #{tpu_custom_call.1} parent=1 // pred_check_branch
      %59 = sbr.rel (0) target = $region25
    $region24: #{tpu_custom_call.1} parent=1 // pred_region
      _
    $region25: #{tpu_custom_call.1} parent=1 // pred_fallthru
      _
    // Predicated region
    $region26: #{tpu_custom_call.1} parent=1 // pred_check
      _
    $region27: #{tpu_custom_call.1} parent=1 // pred_check_branch
      %61 = sbr.rel (0) target = $region29
    $region28: #{tpu_custom_call.1} parent=1 // pred_region
      %63 = dma.done [#allocation7], 256
    $region29: #{tpu_custom_call.1} parent=1 // pred_fallthru
      _
    // Predicated region
    $region30: #{tpu_custom_call.1} parent=1 // pred_check
      _
    $region31: #{tpu_custom_call.1} parent=1 // pred_check_branch
      %65 = sbr.rel (0) target = $region33
    $region32: #{tpu_custom_call.1} parent=1 // pred_region
      %67 = dma.done [#allocation10], 256
    $region33: #{tpu_custom_call.1} parent=1 // pred_fallthru
      _
    // Predicated region
    $region34: #{tpu_custom_call.1} parent=1 // pred_check
      _
    $region35: #{tpu_custom_call.1} parent=1 // pred_check_branch
      %69 = sbr.rel (0) target = $region37
    $region36: #{tpu_custom_call.1} parent=1 // pred_region
      %71 = dma.done [#allocation10], 1024
    $region37: #{tpu_custom_call.1} parent=1 // pred_fallthru
      _
    %p73 = scmp.eq.s32.totalorder 0, 0
    // Predicated region
    $region38: #{tpu_custom_call.1} parent=1 // pred_check
      %p74 = pneg %p73
    $region39: #{tpu_custom_call.1} parent=1 // pred_check_branch
      %76 = sbr.rel (%p74) target = $region41
    $region40: #{tpu_custom_call.1} parent=1 // pred_region
      %vm77 = vcmask 517120
      %78 = vst.msk [vmem:[#allocation2] sm:$0x3] %vm77, 0.0
      %79 = vst.msk [vmem:[#allocation3] sm:$0x3] %vm77, 0.0
    $region41: #{tpu_custom_call.1} parent=1 // pred_fallthru
      _
    %v80 = vld [vmem:[#allocation9] sm:$0xff]
    %v81 = vld [vmem:[#allocation9 + $0x8] sm:$0xff]
    %v82 = vld [vmem:[#allocation11] sm:$0xff]
    %v83 = vld [vmem:[#allocation11 + $0x8] sm:$0xff]
    %v84 = vld [vmem:[#allocation11 + $0x10] sm:$0xff]
    %v85 = vld [vmem:[#allocation11 + $0x18] sm:$0xff]
    %v86 = vld [vmem:[#allocation11 + $0x20] sm:$0xff]
    %v87 = vld [vmem:[#allocation11 + $0x28] sm:$0xff]
    %v88 = vld [vmem:[#allocation11 + $0x30] sm:$0xff]
    %v89 = vld [vmem:[#allocation11 + $0x38] sm:$0xff]
    %v90 = vld [vmem:[%s3] sm:$0x3]
    %v92 = vperm.slane %v90, 0
    %v93 = vperm.slane %v90, 1
    %v96 = vld [vmem:[#allocation2] sm:$0x3]
    %v97 = vld [vmem:[#allocation3] sm:$0x3]
    %v98 = vld [vmem:[#allocation6] sm:$0x3]
    %v99 = vpack.c.bf16 %v98, %v98
    %v100 = vpack.c.bf16 %v96, %v96
    %v109 = vunpack.c.l.b16 %v82
    %v110 = vunpack.c.h.b16 %v82
    %v111 = vunpack.c.l.b16 %v83
    %v112 = vunpack.c.h.b16 %v83
    %v113 = vunpack.c.l.b16 %v84
    %v114 = vunpack.c.h.b16 %v84
    %v115 = vunpack.c.l.b16 %v85
    %v116 = vunpack.c.h.b16 %v85
    %v117 = vunpack.c.l.b16 %v86
    %v118 = vunpack.c.h.b16 %v86
    %v119 = vunpack.c.l.b16 %v87
    %v120 = vunpack.c.h.b16 %v87
    %v121 = vunpack.c.l.b16 %v88
    %v122 = vunpack.c.h.b16 %v88
    %v123 = vunpack.c.l.b16 %v89
    %v124 = vunpack.c.h.b16 %v89
    %v125 = vpack.c.b16 %v111, %v109
    %v126 = vpack.c.b16 %v112, %v110
    %v127 = vpack.c.b16 %v115, %v113
    %v128 = vpack.c.b16 %v116, %v114
    %v129 = vpack.c.b16 %v119, %v117
    %v130 = vpack.c.b16 %v120, %v118
    %v131 = vpack.c.b16 %v123, %v121
    %v132 = vpack.c.b16 %v124, %v122
    %vm141 = vcmask 523264
    %v143 = vsel %vm141, %v100, 0
    %145 = vmatpush.bf16.msra.mxu0 0
    %146 = vmatpush.bf16.msra.mxu0 0
    %147 = vmatpush.bf16.msra.mxu0 0
    %148 = vmatpush.bf16.msra.mxu0 0
    %149 = vmatpush.bf16.msra.mxu0 %v131
    %150 = vmatpush.bf16.msra.mxu0 %v129
    %151 = vmatpush.bf16.msra.mxu0 %v127
    %152 = vmatpush.bf16.msra.mxu0 %v125
    %153 = vmatmul.bf16.gmra.mxu0 %v143
    %v154 = vpop.f32.mrf.mxu0
    %v155 = vadd.f32 0.0, %v154
    %v156 = vpop.f32.mrf.mxu0
    %157 = vdwg.mxu0
    %158 = vmatpush.bf16.msra.mxu0 0
    %159 = vmatpush.bf16.msra.mxu0 0
    %160 = vmatpush.bf16.msra.mxu0 0
    %161 = vmatpush.bf16.msra.mxu0 0
    %162 = vmatpush.bf16.msra.mxu0 %v132
    %163 = vmatpush.bf16.msra.mxu0 %v130
    %164 = vmatpush.bf16.msra.mxu0 %v128
    %165 = vmatpush.bf16.msra.mxu0 %v126
    %166 = vmatmul.bf16.gmra.mxu0 %v143
    %v167 = vpop.f32.mrf.mxu0
    %v168 = vadd.f32 0.0, %v167
    %v169 = vpop.f32.mrf.mxu0
    %170 = vdwg.mxu0
    %v173 = vunpack.c.l.b16 %v80
    %v174 = vunpack.c.h.b16 %v80
    %v175 = vunpack.c.l.b16 %v81
    %v176 = vunpack.c.h.b16 %v81
    %v177 = vpack.c.b16 %v175, %v173
    %v178 = vpack.c.b16 %v176, %v174
    %vm181 = vcmask 130048
    %v183 = vsel %vm181, %v99, 0
    %185 = vmatpush.bf16.msra.mxu0 0
    %186 = vmatpush.bf16.msra.mxu0 0
    %187 = vmatpush.bf16.msra.mxu0 0
    %188 = vmatpush.bf16.msra.mxu0 0
    %189 = vmatpush.bf16.msra.mxu0 0
    %190 = vmatpush.bf16.msra.mxu0 0
    %191 = vmatpush.bf16.msra.mxu0 0
    %192 = vmatpush.bf16.msra.mxu0 %v177
    %193 = vmatmul.bf16.gmra.mxu0 %v183
    %v194 = vpop.f32.mrf.mxu0
    %v195 = vadd.f32 %v155, %v194
    %v196 = vpop.f32.mrf.mxu0
    %197 = vdwg.mxu0
    %198 = vmatpush.bf16.msra.mxu0 0
    %199 = vmatpush.bf16.msra.mxu0 0
    %200 = vmatpush.bf16.msra.mxu0 0
    %201 = vmatpush.bf16.msra.mxu0 0
    %202 = vmatpush.bf16.msra.mxu0 0
    %203 = vmatpush.bf16.msra.mxu0 0
    %204 = vmatpush.bf16.msra.mxu0 0
    %205 = vmatpush.bf16.msra.mxu0 %v178
    %206 = vmatmul.bf16.gmra.mxu0 %v183
    %v207 = vpop.f32.mrf.mxu0
    %v208 = vadd.f32 %v168, %v207
    %v209 = vpop.f32.mrf.mxu0
    %210 = vdwg.mxu0
    %v211 = vadd.f32 %v195, %v92
    %v212 = vadd.f32 %v208, %v93
    %v213 = vxor.u32 %v211, 2147483648
    %v214 = vxor.u32 %v212, 2147483648
    %v215 = vmul.f32 %v213, 1.442695
    %v216 = vpow.pop %v215
    %v217 = vmul.f32 %v214, 1.442695
    %v218 = vpow.pop %v217
    %v219 = vadd.f32 %v216, 1.0
    %v220 = vadd.f32 %v218, 1.0
    %v221 = vrcp.pop %v219
    %v222 = vmul.f32 %v219, %v221
    %v223 = vsub.f32 1.0, %v222
    %v224 = vmul.f32 %v221, %v223
    %v225 = vadd.f32 %v221, %v224
    %vm226 = vweird.f32 %v219
    %vm227 = vweird.f32 %v221
    %vm228 = vmor %vm226, %vm227
    %v229 = vsel %vm228, %v221, %v225
    %v230 = vand.u32 2147483647, %v219
    %vm231 = vcmp.eq.f32.partialorder %v230, 8.507059e+37
    %v232 = vand.u32 %v219, 2147483648
    %v233 = vor.u32 1.1754944e-38, %v232
    %v234 = vsel %vm231, %v233, %v229
    %v235 = vmul.f32 1.0, %v234
    %v236 = vrcp.pop %v220
    %v237 = vmul.f32 %v220, %v236
    %v238 = vsub.f32 1.0, %v237
    %v239 = vmul.f32 %v236, %v238
    %v240 = vadd.f32 %v236, %v239
    %vm241 = vweird.f32 %v220
    %vm242 = vweird.f32 %v236
    %vm243 = vmor %vm241, %vm242
    %v244 = vsel %vm243, %v236, %v240
    %v245 = vand.u32 2147483647, %v220
    %vm246 = vcmp.eq.f32.partialorder %v245, 8.507059e+37
    %v247 = vand.u32 %v220, 2147483648
    %v248 = vor.u32 1.1754944e-38, %v247
    %v249 = vsel %vm246, %v248, %v244
    %v250 = vmul.f32 1.0, %v249
    %v251 = vtanh.pop %v212
    %253 = vrot.lane.b32.xlu0 %v97, 64
    %v254 = vpop.permute.xlu0 %253
    %v256 = vmul.f32 %v235, %v254
    %258 = vrot.lane.b32.xlu0 %v251, 64
    %v259 = vpop.permute.xlu0 %258
    %v261 = vmul.f32 %v235, %v259
    %263 = vrot.lane.b32.xlu0 %v261, 64
    %v264 = vpop.permute.xlu0 %263
    %v266 = vadd.f32 %v256, %v264
    %v267 = vtanh.pop %v266
    %269 = vrot.lane.b32.xlu0 %v267, 64
    %v270 = vpop.permute.xlu0 %269
    %v272 = vmul.f32 %v250, %v270
    %vm273 = vcmask 517120
    %274 = vst.msk [vmem:[#allocation4] sm:$0x3] %vm273, %v272
    %s275 = scalar_lea.vmem [#allocation6], 2
    %v276 = vld [vmem:[%s275] sm:$0x3]
    %v277 = vpack.c.bf16 %v276, %v276
    %v278 = vpack.c.bf16 %v272, %v272
    %v280 = vsel %vm141, %v278, 0
    %282 = vmatpush.bf16.msra.mxu0 0
    %283 = vmatpush.bf16.msra.mxu0 0
    %284 = vmatpush.bf16.msra.mxu0 0
    %285 = vmatpush.bf16.msra.mxu0 0
    %286 = vmatpush.bf16.msra.mxu0 %v131
    %287 = vmatpush.bf16.msra.mxu0 %v129
    %288 = vmatpush.bf16.msra.mxu0 %v127
    %289 = vmatpush.bf16.msra.mxu0 %v125
    %290 = vmatmul.bf16.gmra.mxu0 %v280
    %v291 = vpop.f32.mrf.mxu0
    %v292 = vadd.f32 0.0, %v291
    %v293 = vpop.f32.mrf.mxu0
    %294 = vdwg.mxu0
    %295 = vmatpush.bf16.msra.mxu0 0
    %296 = vmatpush.bf16.msra.mxu0 0
    %297 = vmatpush.bf16.msra.mxu0 0
    %298 = vmatpush.bf16.msra.mxu0 0
    %299 = vmatpush.bf16.msra.mxu0 %v132
    %300 = vmatpush.bf16.msra.mxu0 %v130
    %301 = vmatpush.bf16.msra.mxu0 %v128
    %302 = vmatpush.bf16.msra.mxu0 %v126
    %303 = vmatmul.bf16.gmra.mxu0 %v280
    %v304 = vpop.f32.mrf.mxu0
    %v305 = vadd.f32 0.0, %v304
    %v306 = vpop.f32.mrf.mxu0
    %307 = vdwg.mxu0
    %v309 = vsel %vm181, %v277, 0
    %311 = vmatpush.bf16.msra.mxu0 0
    %312 = vmatpush.bf16.msra.mxu0 0
    %313 = vmatpush.bf16.msra.mxu0 0
    %314 = vmatpush.bf16.msra.mxu0 0
    %315 = vmatpush.bf16.msra.mxu0 0
    %316 = vmatpush.bf16.msra.mxu0 0
    %317 = vmatpush.bf16.msra.mxu0 0
    %318 = vmatpush.bf16.msra.mxu0 %v177
    %319 = vmatmul.bf16.gmra.mxu0 %v309
    %v320 = vpop.f32.mrf.mxu0
    %v321 = vadd.f32 %v292, %v320
    %v322 = vpop.f32.mrf.mxu0
    %323 = vdwg.mxu0
    %324 = vmatpush.bf16.msra.mxu0 0
    %325 = vmatpush.bf16.msra.mxu0 0
    %326 = vmatpush.bf16.msra.mxu0 0
    %327 = vmatpush.bf16.msra.mxu0 0
    %328 = vmatpush.bf16.msra.mxu0 0
    %329 = vmatpush.bf16.msra.mxu0 0
    %330 = vmatpush.bf16.msra.mxu0 0
    %331 = vmatpush.bf16.msra.mxu0 %v178
    %332 = vmatmul.bf16.gmra.mxu0 %v309
    %v333 = vpop.f32.mrf.mxu0
    %v334 = vadd.f32 %v305, %v333
    %v335 = vpop.f32.mrf.mxu0
    %336 = vdwg.mxu0
    %v337 = vadd.f32 %v321, %v92
    %v338 = vadd.f32 %v334, %v93
    %v339 = vxor.u32 %v337, 2147483648
    %v340 = vxor.u32 %v338, 2147483648
    %v341 = vmul.f32 %v339, 1.442695
    %v342 = vpow.pop %v341
    %v343 = vmul.f32 %v340, 1.442695
    %v344 = vpow.pop %v343
    %v345 = vadd.f32 %v342, 1.0
    %v346 = vadd.f32 %v344, 1.0
    %v347 = vrcp.pop %v345
    %v348 = vmul.f32 %v345, %v347
    %v349 = vsub.f32 1.0, %v348
    %v350 = vmul.f32 %v347, %v349
    %v351 = vadd.f32 %v347, %v350
    %vm352 = vweird.f32 %v345
    %vm353 = vweird.f32 %v347
    %vm354 = vmor %vm352, %vm353
    %v355 = vsel %vm354, %v347, %v351
    %v356 = vand.u32 2147483647, %v345
    %vm357 = vcmp.eq.f32.partialorder %v356, 8.507059e+37
    %v358 = vand.u32 %v345, 2147483648
    %v359 = vor.u32 1.1754944e-38, %v358
    %v360 = vsel %vm357, %v359, %v355
    %v361 = vmul.f32 1.0, %v360
    %v362 = vrcp.pop %v346
    %v363 = vmul.f32 %v346, %v362
    %v364 = vsub.f32 1.0, %v363
    %v365 = vmul.f32 %v362, %v364
    %v366 = vadd.f32 %v362, %v365
    %vm367 = vweird.f32 %v346
    %vm368 = vweird.f32 %v362
    %vm369 = vmor %vm367, %vm368
    %v370 = vsel %vm369, %v362, %v366
    %v371 = vand.u32 2147483647, %v346
    %vm372 = vcmp.eq.f32.partialorder %v371, 8.507059e+37
    %v373 = vand.u32 %v346, 2147483648
    %v374 = vor.u32 1.1754944e-38, %v373
    %v375 = vsel %vm372, %v374, %v370
    %v376 = vmul.f32 1.0, %v375
    %v377 = vtanh.pop %v338
    %v378 = vmul.f32 %v361, %v266
    %380 = vrot.lane.b32.xlu0 %v377, 64
    %v381 = vpop.permute.xlu0 %380
    %v383 = vmul.f32 %v361, %v381
    %385 = vrot.lane.b32.xlu0 %v383, 64
    %v386 = vpop.permute.xlu0 %385
    %v388 = vadd.f32 %v378, %v386
    %v389 = vtanh.pop %v388
    %391 = vrot.lane.b32.xlu0 %v389, 64
    %v392 = vpop.permute.xlu0 %391
    %v394 = vmul.f32 %v376, %v392
    %s395 = scalar_lea.vmem [#allocation4], 2
    %396 = vst.msk [vmem:[%s395] sm:$0x3] %vm273, %v394
    %s397 = scalar_lea.vmem [#allocation6], 4
    %v398 = vld [vmem:[%s397] sm:$0x3]
    %v399 = vpack.c.bf16 %v398, %v398
    %v400 = vpack.c.bf16 %v394, %v394
    %v402 = vsel %vm141, %v400, 0
    %404 = vmatpush.bf16.msra.mxu0 0
    %405 = vmatpush.bf16.msra.mxu0 0
    %406 = vmatpush.bf16.msra.mxu0 0
    %407 = vmatpush.bf16.msra.mxu0 0
    %408 = vmatpush.bf16.msra.mxu0 %v131
    %409 = vmatpush.bf16.msra.mxu0 %v129
    %410 = vmatpush.bf16.msra.mxu0 %v127
    %411 = vmatpush.bf16.msra.mxu0 %v125
    %412 = vmatmul.bf16.gmra.mxu0 %v402
    %v413 = vpop.f32.mrf.mxu0
    %v414 = vadd.f32 0.0, %v413
    %v415 = vpop.f32.mrf.mxu0
    %416 = vdwg.mxu0
    %417 = vmatpush.bf16.msra.mxu0 0
    %418 = vmatpush.bf16.msra.mxu0 0
    %419 = vmatpush.bf16.msra.mxu0 0
    %420 = vmatpush.bf16.msra.mxu0 0
    %421 = vmatpush.bf16.msra.mxu0 %v132
    %422 = vmatpush.bf16.msra.mxu0 %v130
    %423 = vmatpush.bf16.msra.mxu0 %v128
    %424 = vmatpush.bf16.msra.mxu0 %v126
    %425 = vmatmul.bf16.gmra.mxu0 %v402
    %v426 = vpop.f32.mrf.mxu0
    %v427 = vadd.f32 0.0, %v426
    %v428 = vpop.f32.mrf.mxu0
    %429 = vdwg.mxu0
    %v431 = vsel %vm181, %v399, 0
    %433 = vmatpush.bf16.msra.mxu0 0
    %434 = vmatpush.bf16.msra.mxu0 0
    %435 = vmatpush.bf16.msra.mxu0 0
    %436 = vmatpush.bf16.msra.mxu0 0
    %437 = vmatpush.bf16.msra.mxu0 0
    %438 = vmatpush.bf16.msra.mxu0 0
    %439 = vmatpush.bf16.msra.mxu0 0
    %440 = vmatpush.bf16.msra.mxu0 %v177
    %441 = vmatmul.bf16.gmra.mxu0 %v431
    %v442 = vpop.f32.mrf.mxu0
    %v443 = vadd.f32 %v414, %v442
    %v444 = vpop.f32.mrf.mxu0
    %445 = vdwg.mxu0
    %446 = vmatpush.bf16.msra.mxu0 0
    %447 = vmatpush.bf16.msra.mxu0 0
    %448 = vmatpush.bf16.msra.mxu0 0
    %449 = vmatpush.bf16.msra.mxu0 0
    %450 = vmatpush.bf16.msra.mxu0 0
    %451 = vmatpush.bf16.msra.mxu0 0
    %452 = vmatpush.bf16.msra.mxu0 0
    %453 = vmatpush.bf16.msra.mxu0 %v178
    %454 = vmatmul.bf16.gmra.mxu0 %v431
    %v455 = vpop.f32.mrf.mxu0
    %v456 = vadd.f32 %v427, %v455
    %v457 = vpop.f32.mrf.mxu0
    %458 = vdwg.mxu0
    %v459 = vadd.f32 %v443, %v92
    %v460 = vadd.f32 %v456, %v93
    %v461 = vxor.u32 %v459, 2147483648
    %v462 = vxor.u32 %v460, 2147483648
    %v463 = vmul.f32 %v461, 1.442695
    %v464 = vpow.pop %v463
    %v465 = vmul.f32 %v462, 1.442695
    %v466 = vpow.pop %v465
    %v467 = vadd.f32 %v464, 1.0
    %v468 = vadd.f32 %v466, 1.0
    %v469 = vrcp.pop %v467
    %v470 = vmul.f32 %v467, %v469
    %v471 = vsub.f32 1.0, %v470
    %v472 = vmul.f32 %v469, %v471
    %v473 = vadd.f32 %v469, %v472
    %vm474 = vweird.f32 %v467
    %vm475 = vweird.f32 %v469
    %vm476 = vmor %vm474, %vm475
    %v477 = vsel %vm476, %v469, %v473
    %v478 = vand.u32 2147483647, %v467
    %vm479 = vcmp.eq.f32.partialorder %v478, 8.507059e+37
    %v480 = vand.u32 %v467, 2147483648
    %v481 = vor.u32 1.1754944e-38, %v480
    %v482 = vsel %vm479, %v481, %v477
    %v483 = vmul.f32 1.0, %v482
    %v484 = vrcp.pop %v468
    %v485 = vmul.f32 %v468, %v484
    %v486 = vsub.f32 1.0, %v485
    %v487 = vmul.f32 %v484, %v486
    %v488 = vadd.f32 %v484, %v487
    %vm489 = vweird.f32 %v468
    %vm490 = vweird.f32 %v484
    %vm491 = vmor %vm489, %vm490
    %v492 = vsel %vm491, %v484, %v488
    %v493 = vand.u32 2147483647, %v468
    %vm494 = vcmp.eq.f32.partialorder %v493, 8.507059e+37
    %v495 = vand.u32 %v468, 2147483648
    %v496 = vor.u32 1.1754944e-38, %v495
    %v497 = vsel %vm494, %v496, %v492
    %v498 = vmul.f32 1.0, %v497
    %v499 = vtanh.pop %v460
    %v500 = vmul.f32 %v483, %v388
    %502 = vrot.lane.b32.xlu0 %v499, 64
    %v503 = vpop.permute.xlu0 %502
    %v505 = vmul.f32 %v483, %v503
    %507 = vrot.lane.b32.xlu0 %v505, 64
    %v508 = vpop.permute.xlu0 %507
    %v510 = vadd.f32 %v500, %v508
    %v511 = vtanh.pop %v510
    %513 = vrot.lane.b32.xlu0 %v511, 64
    %v514 = vpop.permute.xlu0 %513
    %v516 = vmul.f32 %v498, %v514
    %s517 = scalar_lea.vmem [#allocation4], 4
    %518 = vst.msk [vmem:[%s517] sm:$0x3] %vm273, %v516
    %s519 = scalar_lea.vmem [#allocation6], 6
    %v520 = vld [vmem:[%s519] sm:$0x3]
    %v521 = vpack.c.bf16 %v520, %v520
    %v522 = vpack.c.bf16 %v516, %v516
    %v524 = vsel %vm141, %v522, 0
    %526 = vmatpush.bf16.msra.mxu0 0
    %527 = vmatpush.bf16.msra.mxu0 0
    %528 = vmatpush.bf16.msra.mxu0 0
    %529 = vmatpush.bf16.msra.mxu0 0
    %530 = vmatpush.bf16.msra.mxu0 %v131
    %531 = vmatpush.bf16.msra.mxu0 %v129
    %532 = vmatpush.bf16.msra.mxu0 %v127
    %533 = vmatpush.bf16.msra.mxu0 %v125
    %534 = vmatmul.bf16.gmra.mxu0 %v524
    %v535 = vpop.f32.mrf.mxu0
    %v536 = vadd.f32 0.0, %v535
    %v537 = vpop.f32.mrf.mxu0
    %538 = vdwg.mxu0
    %539 = vmatpush.bf16.msra.mxu0 0
    %540 = vmatpush.bf16.msra.mxu0 0
    %541 = vmatpush.bf16.msra.mxu0 0
    %542 = vmatpush.bf16.msra.mxu0 0
    %543 = vmatpush.bf16.msra.mxu0 %v132
    %544 = vmatpush.bf16.msra.mxu0 %v130
    %545 = vmatpush.bf16.msra.mxu0 %v128
    %546 = vmatpush.bf16.msra.mxu0 %v126
    %547 = vmatmul.bf16.gmra.mxu0 %v524
    %v548 = vpop.f32.mrf.mxu0
    %v549 = vadd.f32 0.0, %v548
    %v550 = vpop.f32.mrf.mxu0
    %551 = vdwg.mxu0
    %v553 = vsel %vm181, %v521, 0
    %555 = vmatpush.bf16.msra.mxu0 0
    %556 = vmatpush.bf16.msra.mxu0 0
    %557 = vmatpush.bf16.msra.mxu0 0
    %558 = vmatpush.bf16.msra.mxu0 0
    %559 = vmatpush.bf16.msra.mxu0 0
    %560 = vmatpush.bf16.msra.mxu0 0
    %561 = vmatpush.bf16.msra.mxu0 0
    %562 = vmatpush.bf16.msra.mxu0 %v177
    %563 = vmatmul.bf16.gmra.mxu0 %v553
    %v564 = vpop.f32.mrf.mxu0
    %v565 = vadd.f32 %v536, %v564
    %v566 = vpop.f32.mrf.mxu0
    %567 = vdwg.mxu0
    %568 = vmatpush.bf16.msra.mxu0 0
    %569 = vmatpush.bf16.msra.mxu0 0
    %570 = vmatpush.bf16.msra.mxu0 0
    %571 = vmatpush.bf16.msra.mxu0 0
    %572 = vmatpush.bf16.msra.mxu0 0
    %573 = vmatpush.bf16.msra.mxu0 0
    %574 = vmatpush.bf16.msra.mxu0 0
    %575 = vmatpush.bf16.msra.mxu0 %v178
    %576 = vmatmul.bf16.gmra.mxu0 %v553
    %v577 = vpop.f32.mrf.mxu0
    %v578 = vadd.f32 %v549, %v577
    %v579 = vpop.f32.mrf.mxu0
    %580 = vdwg.mxu0
    %v581 = vadd.f32 %v565, %v92
    %v582 = vadd.f32 %v578, %v93
    %v583 = vxor.u32 %v581, 2147483648
    %v584 = vxor.u32 %v582, 2147483648
    %v585 = vmul.f32 %v583, 1.442695
    %v586 = vpow.pop %v585
    %v587 = vmul.f32 %v584, 1.442695
    %v588 = vpow.pop %v587
    %v589 = vadd.f32 %v586, 1.0
    %v590 = vadd.f32 %v588, 1.0
    %v591 = vrcp.pop %v589
    %v592 = vmul.f32 %v589, %v591
    %v593 = vsub.f32 1.0, %v592
    %v594 = vmul.f32 %v591, %v593
    %v595 = vadd.f32 %v591, %v594
    %vm596 = vweird.f32 %v589
    %vm597 = vweird.f32 %v591
    %vm598 = vmor %vm596, %vm597
    %v599 = vsel %vm598, %v591, %v595
    %v600 = vand.u32 2147483647, %v589
    %vm601 = vcmp.eq.f32.partialorder %v600, 8.507059e+37
    %v602 = vand.u32 %v589, 2147483648
    %v603 = vor.u32 1.1754944e-38, %v602
    %v604 = vsel %vm601, %v603, %v599
    %v605 = vmul.f32 1.0, %v604
    %v606 = vrcp.pop %v590
    %v607 = vmul.f32 %v590, %v606
    %v608 = vsub.f32 1.0, %v607
    %v609 = vmul.f32 %v606, %v608
    %v610 = vadd.f32 %v606, %v609
    %vm611 = vweird.f32 %v590
    %vm612 = vweird.f32 %v606
    %vm613 = vmor %vm611, %vm612
    %v614 = vsel %vm613, %v606, %v610
    %v615 = vand.u32 2147483647, %v590
    %vm616 = vcmp.eq.f32.partialorder %v615, 8.507059e+37
    %v617 = vand.u32 %v590, 2147483648
    %v618 = vor.u32 1.1754944e-38, %v617
    %v619 = vsel %vm616, %v618, %v614
    %v620 = vmul.f32 1.0, %v619
    %v621 = vtanh.pop %v582
    %v622 = vmul.f32 %v605, %v510
    %624 = vrot.lane.b32.xlu0 %v621, 64
    %v625 = vpop.permute.xlu0 %624
    %v627 = vmul.f32 %v605, %v625
    %629 = vrot.lane.b32.xlu0 %v627, 64
    %v630 = vpop.permute.xlu0 %629
    %v632 = vadd.f32 %v622, %v630
    %v633 = vtanh.pop %v632
    %635 = vrot.lane.b32.xlu0 %v633, 64
    %v636 = vpop.permute.xlu0 %635
    %v638 = vmul.f32 %v620, %v636
    %s639 = scalar_lea.vmem [#allocation4], 6
    %640 = vst.msk [vmem:[%s639] sm:$0x3] %vm273, %v638
    %s641 = scalar_lea.vmem [#allocation6], 8
    %v642 = vld [vmem:[%s641] sm:$0x3]
    %v643 = vpack.c.bf16 %v642, %v642
    %v644 = vpack.c.bf16 %v638, %v638
    %v646 = vsel %vm141, %v644, 0
    %648 = vmatpush.bf16.msra.mxu0 0
    %649 = vmatpush.bf16.msra.mxu0 0
    %650 = vmatpush.bf16.msra.mxu0 0
    %651 = vmatpush.bf16.msra.mxu0 0
    %652 = vmatpush.bf16.msra.mxu0 %v131
    %653 = vmatpush.bf16.msra.mxu0 %v129
    %654 = vmatpush.bf16.msra.mxu0 %v127
    %655 = vmatpush.bf16.msra.mxu0 %v125
    %656 = vmatmul.bf16.gmra.mxu0 %v646
    %v657 = vpop.f32.mrf.mxu0
    %v658 = vadd.f32 0.0, %v657
    %v659 = vpop.f32.mrf.mxu0
    %660 = vdwg.mxu0
    %661 = vmatpush.bf16.msra.mxu0 0
    %662 = vmatpush.bf16.msra.mxu0 0
    %663 = vmatpush.bf16.msra.mxu0 0
    %664 = vmatpush.bf16.msra.mxu0 0
    %665 = vmatpush.bf16.msra.mxu0 %v132
    %666 = vmatpush.bf16.msra.mxu0 %v130
    %667 = vmatpush.bf16.msra.mxu0 %v128
    %668 = vmatpush.bf16.msra.mxu0 %v126
    %669 = vmatmul.bf16.gmra.mxu0 %v646
    %v670 = vpop.f32.mrf.mxu0
    %v671 = vadd.f32 0.0, %v670
    %v672 = vpop.f32.mrf.mxu0
    %673 = vdwg.mxu0
    %v675 = vsel %vm181, %v643, 0
    %677 = vmatpush.bf16.msra.mxu0 0
    %678 = vmatpush.bf16.msra.mxu0 0
    %679 = vmatpush.bf16.msra.mxu0 0
    %680 = vmatpush.bf16.msra.mxu0 0
    %681 = vmatpush.bf16.msra.mxu0 0
    %682 = vmatpush.bf16.msra.mxu0 0
    %683 = vmatpush.bf16.msra.mxu0 0
    %684 = vmatpush.bf16.msra.mxu0 %v177
    %685 = vmatmul.bf16.gmra.mxu0 %v675
    %v686 = vpop.f32.mrf.mxu0
    %v687 = vadd.f32 %v658, %v686
    %v688 = vpop.f32.mrf.mxu0
    %689 = vdwg.mxu0
    %690 = vmatpush.bf16.msra.mxu0 0
    %691 = vmatpush.bf16.msra.mxu0 0
    %692 = vmatpush.bf16.msra.mxu0 0
    %693 = vmatpush.bf16.msra.mxu0 0
    %694 = vmatpush.bf16.msra.mxu0 0
    %695 = vmatpush.bf16.msra.mxu0 0
    %696 = vmatpush.bf16.msra.mxu0 0
    %697 = vmatpush.bf16.msra.mxu0 %v178
    %698 = vmatmul.bf16.gmra.mxu0 %v675
    %v699 = vpop.f32.mrf.mxu0
    %v700 = vadd.f32 %v671, %v699
    %v701 = vpop.f32.mrf.mxu0
    %702 = vdwg.mxu0
    %v703 = vadd.f32 %v687, %v92
    %v704 = vadd.f32 %v700, %v93
    %v705 = vxor.u32 %v703, 2147483648
    %v706 = vxor.u32 %v704, 2147483648
    %v707 = vmul.f32 %v705, 1.442695
    %v708 = vpow.pop %v707
    %v709 = vmul.f32 %v706, 1.442695
    %v710 = vpow.pop %v709
    %v711 = vadd.f32 %v708, 1.0
    %v712 = vadd.f32 %v710, 1.0
    %v713 = vrcp.pop %v711
    %v714 = vmul.f32 %v711, %v713
    %v715 = vsub.f32 1.0, %v714
    %v716 = vmul.f32 %v713, %v715
    %v717 = vadd.f32 %v713, %v716
    %vm718 = vweird.f32 %v711
    %vm719 = vweird.f32 %v713
    %vm720 = vmor %vm718, %vm719
    %v721 = vsel %vm720, %v713, %v717
    %v722 = vand.u32 2147483647, %v711
    %vm723 = vcmp.eq.f32.partialorder %v722, 8.507059e+37
    %v724 = vand.u32 %v711, 2147483648
    %v725 = vor.u32 1.1754944e-38, %v724
    %v726 = vsel %vm723, %v725, %v721
    %v727 = vmul.f32 1.0, %v726
    %v728 = vrcp.pop %v712
    %v729 = vmul.f32 %v712, %v728
    %v730 = vsub.f32 1.0, %v729
    %v731 = vmul.f32 %v728, %v730
    %v732 = vadd.f32 %v728, %v731
    %vm733 = vweird.f32 %v712
    %vm734 = vweird.f32 %v728
    %vm735 = vmor %vm733, %vm734
    %v736 = vsel %vm735, %v728, %v732
    %v737 = vand.u32 2147483647, %v712
    %vm738 = vcmp.eq.f32.partialorder %v737, 8.507059e+37
    %v739 = vand.u32 %v712, 2147483648
    %v740 = vor.u32 1.1754944e-38, %v739
    %v741 = vsel %vm738, %v740, %v736
    %v742 = vmul.f32 1.0, %v741
    %v743 = vtanh.pop %v704
    %v744 = vmul.f32 %v727, %v632
    %746 = vrot.lane.b32.xlu0 %v743, 64
    %v747 = vpop.permute.xlu0 %746
    %v749 = vmul.f32 %v727, %v747
    %751 = vrot.lane.b32.xlu0 %v749, 64
    %v752 = vpop.permute.xlu0 %751
    %v754 = vadd.f32 %v744, %v752
    %v755 = vtanh.pop %v754
    %757 = vrot.lane.b32.xlu0 %v755, 64
    %v758 = vpop.permute.xlu0 %757
    %v760 = vmul.f32 %v742, %v758
    %s761 = scalar_lea.vmem [#allocation4], 8
    %762 = vst.msk [vmem:[%s761] sm:$0x3] %vm273, %v760
    %s763 = scalar_lea.vmem [#allocation6], 10
    %v764 = vld [vmem:[%s763] sm:$0x3]
    %v765 = vpack.c.bf16 %v764, %v764
    %v766 = vpack.c.bf16 %v760, %v760
    %v768 = vsel %vm141, %v766, 0
    %770 = vmatpush.bf16.msra.mxu0 0
    %771 = vmatpush.bf16.msra.mxu0 0
    %772 = vmatpush.bf16.msra.mxu0 0
    %773 = vmatpush.bf16.msra.mxu0 0
    %774 = vmatpush.bf16.msra.mxu0 %v131
    %775 = vmatpush.bf16.msra.mxu0 %v129
    %776 = vmatpush.bf16.msra.mxu0 %v127
    %777 = vmatpush.bf16.msra.mxu0 %v125
    %778 = vmatmul.bf16.gmra.mxu0 %v768
    %v779 = vpop.f32.mrf.mxu0
    %v780 = vadd.f32 0.0, %v779
    %v781 = vpop.f32.mrf.mxu0
    %782 = vdwg.mxu0
    %783 = vmatpush.bf16.msra.mxu0 0
    %784 = vmatpush.bf16.msra.mxu0 0
    %785 = vmatpush.bf16.msra.mxu0 0
    %786 = vmatpush.bf16.msra.mxu0 0
    %787 = vmatpush.bf16.msra.mxu0 %v132
    %788 = vmatpush.bf16.msra.mxu0 %v130
    %789 = vmatpush.bf16.msra.mxu0 %v128
    %790 = vmatpush.bf16.msra.mxu0 %v126
    %791 = vmatmul.bf16.gmra.mxu0 %v768
    %v792 = vpop.f32.mrf.mxu0
    %v793 = vadd.f32 0.0, %v792
    %v794 = vpop.f32.mrf.mxu0
    %795 = vdwg.mxu0
    %v797 = vsel %vm181, %v765, 0
    %799 = vmatpush.bf16.msra.mxu0 0
    %800 = vmatpush.bf16.msra.mxu0 0
    %801 = vmatpush.bf16.msra.mxu0 0
    %802 = vmatpush.bf16.msra.mxu0 0
    %803 = vmatpush.bf16.msra.mxu0 0
    %804 = vmatpush.bf16.msra.mxu0 0
    %805 = vmatpush.bf16.msra.mxu0 0
    %806 = vmatpush.bf16.msra.mxu0 %v177
    %807 = vmatmul.bf16.gmra.mxu0 %v797
    %v808 = vpop.f32.mrf.mxu0
    %v809 = vadd.f32 %v780, %v808
    %v810 = vpop.f32.mrf.mxu0
    %811 = vdwg.mxu0
    %812 = vmatpush.bf16.msra.mxu0 0
    %813 = vmatpush.bf16.msra.mxu0 0
    %814 = vmatpush.bf16.msra.mxu0 0
    %815 = vmatpush.bf16.msra.mxu0 0
    %816 = vmatpush.bf16.msra.mxu0 0
    %817 = vmatpush.bf16.msra.mxu0 0
    %818 = vmatpush.bf16.msra.mxu0 0
    %819 = vmatpush.bf16.msra.mxu0 %v178
    %820 = vmatmul.bf16.gmra.mxu0 %v797
    %v821 = vpop.f32.mrf.mxu0
    %v822 = vadd.f32 %v793, %v821
    %v823 = vpop.f32.mrf.mxu0
    %824 = vdwg.mxu0
    %v825 = vadd.f32 %v809, %v92
    %v826 = vadd.f32 %v822, %v93
    %v827 = vxor.u32 %v825, 2147483648
    %v828 = vxor.u32 %v826, 2147483648
    %v829 = vmul.f32 %v827, 1.442695
    %v830 = vpow.pop %v829
    %v831 = vmul.f32 %v828, 1.442695
    %v832 = vpow.pop %v831
    %v833 = vadd.f32 %v830, 1.0
    %v834 = vadd.f32 %v832, 1.0
    %v835 = vrcp.pop %v833
    %v836 = vmul.f32 %v833, %v835
    %v837 = vsub.f32 1.0, %v836
    %v838 = vmul.f32 %v835, %v837
    %v839 = vadd.f32 %v835, %v838
    %vm840 = vweird.f32 %v833
    %vm841 = vweird.f32 %v835
    %vm842 = vmor %vm840, %vm841
    %v843 = vsel %vm842, %v835, %v839
    %v844 = vand.u32 2147483647, %v833
    %vm845 = vcmp.eq.f32.partialorder %v844, 8.507059e+37
    %v846 = vand.u32 %v833, 2147483648
    %v847 = vor.u32 1.1754944e-38, %v846
    %v848 = vsel %vm845, %v847, %v843
    %v849 = vmul.f32 1.0, %v848
    %v850 = vrcp.pop %v834
    %v851 = vmul.f32 %v834, %v850
    %v852 = vsub.f32 1.0, %v851
    %v853 = vmul.f32 %v850, %v852
    %v854 = vadd.f32 %v850, %v853
    %vm855 = vweird.f32 %v834
    %vm856 = vweird.f32 %v850
    %vm857 = vmor %vm855, %vm856
    %v858 = vsel %vm857, %v850, %v854
    %v859 = vand.u32 2147483647, %v834
    %vm860 = vcmp.eq.f32.partialorder %v859, 8.507059e+37
    %v861 = vand.u32 %v834, 2147483648
    %v862 = vor.u32 1.1754944e-38, %v861
    %v863 = vsel %vm860, %v862, %v858
    %v864 = vmul.f32 1.0, %v863
    %v865 = vtanh.pop %v826
    %v866 = vmul.f32 %v849, %v754
    %868 = vrot.lane.b32.xlu0 %v865, 64
    %v869 = vpop.permute.xlu0 %868
    %v871 = vmul.f32 %v849, %v869
    %873 = vrot.lane.b32.xlu0 %v871, 64
    %v874 = vpop.permute.xlu0 %873
    %v876 = vadd.f32 %v866, %v874
    %v877 = vtanh.pop %v876
    %879 = vrot.lane.b32.xlu0 %v877, 64
    %v880 = vpop.permute.xlu0 %879
    %v882 = vmul.f32 %v864, %v880
    %s883 = scalar_lea.vmem [#allocation4], 10
    %884 = vst.msk [vmem:[%s883] sm:$0x3] %vm273, %v882
    %s885 = scalar_lea.vmem [#allocation6], 12
    %v886 = vld [vmem:[%s885] sm:$0x3]
    %v887 = vpack.c.bf16 %v886, %v886
    %v888 = vpack.c.bf16 %v882, %v882
    %v890 = vsel %vm141, %v888, 0
    %892 = vmatpush.bf16.msra.mxu0 0
    %893 = vmatpush.bf16.msra.mxu0 0
    %894 = vmatpush.bf16.msra.mxu0 0
    %895 = vmatpush.bf16.msra.mxu0 0
    %896 = vmatpush.bf16.msra.mxu0 %v131
    %897 = vmatpush.bf16.msra.mxu0 %v129
    %898 = vmatpush.bf16.msra.mxu0 %v127
    %899 = vmatpush.bf16.msra.mxu0 %v125
    %900 = vmatmul.bf16.gmra.mxu0 %v890
    %v901 = vpop.f32.mrf.mxu0
    %v902 = vadd.f32 0.0, %v901
    %v903 = vpop.f32.mrf.mxu0
    %904 = vdwg.mxu0
    %905 = vmatpush.bf16.msra.mxu0 0
    %906 = vmatpush.bf16.msra.mxu0 0
    %907 = vmatpush.bf16.msra.mxu0 0
    %908 = vmatpush.bf16.msra.mxu0 0
    %909 = vmatpush.bf16.msra.mxu0 %v132
    %910 = vmatpush.bf16.msra.mxu0 %v130
    %911 = vmatpush.bf16.msra.mxu0 %v128
    %912 = vmatpush.bf16.msra.mxu0 %v126
    %913 = vmatmul.bf16.gmra.mxu0 %v890
    %v914 = vpop.f32.mrf.mxu0
    %v915 = vadd.f32 0.0, %v914
    %v916 = vpop.f32.mrf.mxu0
    %917 = vdwg.mxu0
    %v919 = vsel %vm181, %v887, 0
    %921 = vmatpush.bf16.msra.mxu0 0
    %922 = vmatpush.bf16.msra.mxu0 0
    %923 = vmatpush.bf16.msra.mxu0 0
    %924 = vmatpush.bf16.msra.mxu0 0
    %925 = vmatpush.bf16.msra.mxu0 0
    %926 = vmatpush.bf16.msra.mxu0 0
    %927 = vmatpush.bf16.msra.mxu0 0
    %928 = vmatpush.bf16.msra.mxu0 %v177
    %929 = vmatmul.bf16.gmra.mxu0 %v919
    %v930 = vpop.f32.mrf.mxu0
    %v931 = vadd.f32 %v902, %v930
    %v932 = vpop.f32.mrf.mxu0
    %933 = vdwg.mxu0
    %934 = vmatpush.bf16.msra.mxu0 0
    %935 = vmatpush.bf16.msra.mxu0 0
    %936 = vmatpush.bf16.msra.mxu0 0
    %937 = vmatpush.bf16.msra.mxu0 0
    %938 = vmatpush.bf16.msra.mxu0 0
    %939 = vmatpush.bf16.msra.mxu0 0
    %940 = vmatpush.bf16.msra.mxu0 0
    %941 = vmatpush.bf16.msra.mxu0 %v178
    %942 = vmatmul.bf16.gmra.mxu0 %v919
    %v943 = vpop.f32.mrf.mxu0
    %v944 = vadd.f32 %v915, %v943
    %v945 = vpop.f32.mrf.mxu0
    %946 = vdwg.mxu0
    %v947 = vadd.f32 %v931, %v92
    %v948 = vadd.f32 %v944, %v93
    %v949 = vxor.u32 %v947, 2147483648
    %v950 = vxor.u32 %v948, 2147483648
    %v951 = vmul.f32 %v949, 1.442695
    %v952 = vpow.pop %v951
    %v953 = vmul.f32 %v950, 1.442695
    %v954 = vpow.pop %v953
    %v955 = vadd.f32 %v952, 1.0
    %v956 = vadd.f32 %v954, 1.0
    %v957 = vrcp.pop %v955
    %v958 = vmul.f32 %v955, %v957
    %v959 = vsub.f32 1.0, %v958
    %v960 = vmul.f32 %v957, %v959
    %v961 = vadd.f32 %v957, %v960
    %vm962 = vweird.f32 %v955
    %vm963 = vweird.f32 %v957
    %vm964 = vmor %vm962, %vm963
    %v965 = vsel %vm964, %v957, %v961
    %v966 = vand.u32 2147483647, %v955
    %vm967 = vcmp.eq.f32.partialorder %v966, 8.507059e+37
    %v968 = vand.u32 %v955, 2147483648
    %v969 = vor.u32 1.1754944e-38, %v968
    %v970 = vsel %vm967, %v969, %v965
    %v971 = vmul.f32 1.0, %v970
    %v972 = vrcp.pop %v956
    %v973 = vmul.f32 %v956, %v972
    %v974 = vsub.f32 1.0, %v973
    %v975 = vmul.f32 %v972, %v974
    %v976 = vadd.f32 %v972, %v975
    %vm977 = vweird.f32 %v956
    %vm978 = vweird.f32 %v972
    %vm979 = vmor %vm977, %vm978
    %v980 = vsel %vm979, %v972, %v976
    %v981 = vand.u32 2147483647, %v956
    %vm982 = vcmp.eq.f32.partialorder %v981, 8.507059e+37
    %v983 = vand.u32 %v956, 2147483648
    %v984 = vor.u32 1.1754944e-38, %v983
    %v985 = vsel %vm982, %v984, %v980
    %v986 = vmul.f32 1.0, %v985
    %v987 = vtanh.pop %v948
    %v988 = vmul.f32 %v971, %v876
    %990 = vrot.lane.b32.xlu0 %v987, 64
    %v991 = vpop.permute.xlu0 %990
    %v993 = vmul.f32 %v971, %v991
    %995 = vrot.lane.b32.xlu0 %v993, 64
    %v996 = vpop.permute.xlu0 %995
    %v998 = vadd.f32 %v988, %v996
    %v999 = vtanh.pop %v998
    %1001 = vrot.lane.b32.xlu0 %v999, 64
    %v1002 = vpop.permute.xlu0 %1001
    %v1004 = vmul.f32 %v986, %v1002
    %s1005 = scalar_lea.vmem [#allocation4], 12
    %1006 = vst.msk [vmem:[%s1005] sm:$0x3] %vm273, %v1004
    %s1007 = scalar_lea.vmem [#allocation6], 14
    %v1008 = vld [vmem:[%s1007] sm:$0x3]
    %v1009 = vpack.c.bf16 %v1008, %v1008
    %v1010 = vpack.c.bf16 %v1004, %v1004
    %v1012 = vsel %vm141, %v1010, 0
    %1014 = vmatpush.bf16.msra.mxu0 0
    %1015 = vmatpush.bf16.msra.mxu0 0
    %1016 = vmatpush.bf16.msra.mxu0 0
    %1017 = vmatpush.bf16.msra.mxu0 0
    %1018 = vmatpush.bf16.msra.mxu0 %v131
    %1019 = vmatpush.bf16.msra.mxu0 %v129
    %1020 = vmatpush.bf16.msra.mxu0 %v127
    %1021 = vmatpush.bf16.msra.mxu0 %v125
    %1022 = vmatmul.bf16.gmra.mxu0 %v1012
    %v1023 = vpop.f32.mrf.mxu0
    %v1024 = vadd.f32 0.0, %v1023
    %v1025 = vpop.f32.mrf.mxu0
    %1026 = vdwg.mxu0
    %1027 = vmatpush.bf16.msra.mxu0 0
    %1028 = vmatpush.bf16.msra.mxu0 0
    %1029 = vmatpush.bf16.msra.mxu0 0
    %1030 = vmatpush.bf16.msra.mxu0 0
    %1031 = vmatpush.bf16.msra.mxu0 %v132
    %1032 = vmatpush.bf16.msra.mxu0 %v130
    %1033 = vmatpush.bf16.msra.mxu0 %v128
    %1034 = vmatpush.bf16.msra.mxu0 %v126
    %1035 = vmatmul.bf16.gmra.mxu0 %v1012
    %v1036 = vpop.f32.mrf.mxu0
    %v1037 = vadd.f32 0.0, %v1036
    %v1038 = vpop.f32.mrf.mxu0
    %1039 = vdwg.mxu0
    %v1041 = vsel %vm181, %v1009, 0
    %1043 = vmatpush.bf16.msra.mxu0 0
    %1044 = vmatpush.bf16.msra.mxu0 0
    %1045 = vmatpush.bf16.msra.mxu0 0
    %1046 = vmatpush.bf16.msra.mxu0 0
    %1047 = vmatpush.bf16.msra.mxu0 0
    %1048 = vmatpush.bf16.msra.mxu0 0
    %1049 = vmatpush.bf16.msra.mxu0 0
    %1050 = vmatpush.bf16.msra.mxu0 %v177
    %1051 = vmatmul.bf16.gmra.mxu0 %v1041
    %v1052 = vpop.f32.mrf.mxu0
    %v1053 = vadd.f32 %v1024, %v1052
    %v1054 = vpop.f32.mrf.mxu0
    %1055 = vdwg.mxu0
    %1056 = vmatpush.bf16.msra.mxu0 0
    %1057 = vmatpush.bf16.msra.mxu0 0
    %1058 = vmatpush.bf16.msra.mxu0 0
    %1059 = vmatpush.bf16.msra.mxu0 0
    %1060 = vmatpush.bf16.msra.mxu0 0
    %1061 = vmatpush.bf16.msra.mxu0 0
    %1062 = vmatpush.bf16.msra.mxu0 0
    %1063 = vmatpush.bf16.msra.mxu0 %v178
    %1064 = vmatmul.bf16.gmra.mxu0 %v1041
    %v1065 = vpop.f32.mrf.mxu0
    %v1066 = vadd.f32 %v1037, %v1065
    %v1067 = vpop.f32.mrf.mxu0
    %1068 = vdwg.mxu0
    %v1069 = vadd.f32 %v1053, %v92
    %v1070 = vadd.f32 %v1066, %v93
    %v1071 = vxor.u32 %v1069, 2147483648
    %v1072 = vxor.u32 %v1070, 2147483648
    %v1073 = vmul.f32 %v1071, 1.442695
    %v1074 = vpow.pop %v1073
    %v1075 = vmul.f32 %v1072, 1.442695
    %v1076 = vpow.pop %v1075
    %v1077 = vadd.f32 %v1074, 1.0
    %v1078 = vadd.f32 %v1076, 1.0
    %v1079 = vrcp.pop %v1077
    %v1080 = vmul.f32 %v1077, %v1079
    %v1081 = vsub.f32 1.0, %v1080
    %v1082 = vmul.f32 %v1079, %v1081
    %v1083 = vadd.f32 %v1079, %v1082
    %vm1084 = vweird.f32 %v1077
    %vm1085 = vweird.f32 %v1079
    %vm1086 = vmor %vm1084, %vm1085
    %v1087 = vsel %vm1086, %v1079, %v1083
    %v1088 = vand.u32 2147483647, %v1077
    %vm1089 = vcmp.eq.f32.partialorder %v1088, 8.507059e+37
    %v1090 = vand.u32 %v1077, 2147483648
    %v1091 = vor.u32 1.1754944e-38, %v1090
    %v1092 = vsel %vm1089, %v1091, %v1087
    %v1093 = vmul.f32 1.0, %v1092
    %v1094 = vrcp.pop %v1078
    %v1095 = vmul.f32 %v1078, %v1094
    %v1096 = vsub.f32 1.0, %v1095
    %v1097 = vmul.f32 %v1094, %v1096
    %v1098 = vadd.f32 %v1094, %v1097
    %vm1099 = vweird.f32 %v1078
    %vm1100 = vweird.f32 %v1094
    %vm1101 = vmor %vm1099, %vm1100
    %v1102 = vsel %vm1101, %v1094, %v1098
    %v1103 = vand.u32 2147483647, %v1078
    %vm1104 = vcmp.eq.f32.partialorder %v1103, 8.507059e+37
    %v1105 = vand.u32 %v1078, 2147483648
    %v1106 = vor.u32 1.1754944e-38, %v1105
    %v1107 = vsel %vm1104, %v1106, %v1102
    %v1108 = vmul.f32 1.0, %v1107
    %v1109 = vtanh.pop %v1070
    %v1110 = vmul.f32 %v1093, %v998
    %1112 = vrot.lane.b32.xlu0 %v1109, 64
    %v1113 = vpop.permute.xlu0 %1112
    %v1115 = vmul.f32 %v1093, %v1113
    %1117 = vrot.lane.b32.xlu0 %v1115, 64
    %v1118 = vpop.permute.xlu0 %1117
    %v1120 = vadd.f32 %v1110, %v1118
    %v1121 = vtanh.pop %v1120
    %1123 = vrot.lane.b32.xlu0 %v1121, 64
    %v1124 = vpop.permute.xlu0 %1123
    %v1126 = vmul.f32 %v1108, %v1124
    %s1127 = scalar_lea.vmem [#allocation4], 14
    %1128 = vst.msk [vmem:[%s1127] sm:$0x3] %vm273, %v1126
    %1129 = vst.msk [vmem:[#allocation2] sm:$0x3] %vm273, %v1126
    %1131 = vrot.lane.b32.xlu0 %v1120, 64
    %v1132 = vpop.permute.xlu0 %1131
    %1134 = vst.msk [vmem:[#allocation3] sm:$0x3] %vm273, %v1132
    %v1135 = vld [vmem:[%s4] sm:$0x1]
    %v1136 = vld [vmem:[#allocation4] sm:$0x3]
    %v1137 = vld [vmem:[#allocation4 + $0x2] sm:$0x3]
    %v1138 = vld [vmem:[#allocation4 + $0x4] sm:$0x3]
    %v1139 = vld [vmem:[#allocation4 + $0x6] sm:$0x3]
    %v1140 = vld [vmem:[#allocation4 + $0x8] sm:$0x3]
    %v1141 = vld [vmem:[#allocation4 + $0xa] sm:$0x3]
    %v1142 = vld [vmem:[#allocation4 + $0xc] sm:$0x3]
    %v1143 = vld [vmem:[#allocation4 + $0xe] sm:$0x3]
    %v1145 = vperm.slane %v1135, 0
    %v1147 = vmul.f32 %v1136, %v1145
    %v1148 = vmul.f32 %v1137, %v1145
    %v1149 = vmul.f32 %v1138, %v1145
    %v1150 = vmul.f32 %v1139, %v1145
    %v1151 = vmul.f32 %v1140, %v1145
    %v1152 = vmul.f32 %v1141, %v1145
    %v1153 = vmul.f32 %v1142, %v1145
    %v1154 = vmul.f32 %v1143, %v1145
    %v1155 = vsel %vm273, %v1147, 0.0
    %1156 = vadd.xlane.f32.xlu0 %v1155
    %v1157 = vpop.xlane.xlu0 %1156
    %v1158 = vsel %vm273, %v1148, 0.0
    %1159 = vadd.xlane.f32.xlu0 %v1158
    %v1160 = vpop.xlane.xlu0 %1159
    %v1161 = vsel %vm273, %v1149, 0.0
    %1162 = vadd.xlane.f32.xlu0 %v1161
    %v1163 = vpop.xlane.xlu0 %1162
    %v1164 = vsel %vm273, %v1150, 0.0
    %1165 = vadd.xlane.f32.xlu0 %v1164
    %v1166 = vpop.xlane.xlu0 %1165
    %v1167 = vsel %vm273, %v1151, 0.0
    %1168 = vadd.xlane.f32.xlu0 %v1167
    %v1169 = vpop.xlane.xlu0 %1168
    %v1170 = vsel %vm273, %v1152, 0.0
    %1171 = vadd.xlane.f32.xlu0 %v1170
    %v1172 = vpop.xlane.xlu0 %1171
    %v1173 = vsel %vm273, %v1153, 0.0
    %1174 = vadd.xlane.f32.xlu0 %v1173
    %v1175 = vpop.xlane.xlu0 %1174
    %v1176 = vsel %vm273, %v1154, 0.0
    %1177 = vadd.xlane.f32.xlu0 %v1176
    %v1178 = vpop.xlane.xlu0 %1177
    %v1179 = vlaneseq
    %v1180 = vshrl.u32 %v1179, 7
    %v1181 = vlaneseq
    %v1182 = vand.u32 %v1181, 127
    %vm1183 = vcmp.eq.s32.totalorder %v1180, %v1182
    %v1184 = vsel %vm1183, 1, 0
    %v1185 = vcvt.s32.f32 %v1184
    %s1186 = sld [smem:[#allocation5]]
    %v1187 = vstv %s1186
    %v1196 = vperm.slane %v1157, %v1182
    %v1197 = vperm.slane %v1160, %v1182
    %v1198 = vperm.slane %v1163, %v1182
    %v1199 = vperm.slane %v1166, %v1182
    %v1200 = vperm.slane %v1169, %v1182
    %v1201 = vperm.slane %v1172, %v1182
    %v1202 = vperm.slane %v1175, %v1182
    %v1203 = vperm.slane %v1178, %v1182
    %vm1204 = vcmask 1041409
    %v1205 = vsel %vm1204, %v1197, %v1196
    %vm1206 = vcmask 1042434
    %v1207 = vsel %vm1206, %v1198, %v1205
    %vm1208 = vcmask 1043459
    %v1209 = vsel %vm1208, %v1199, %v1207
    %vm1210 = vcmask 1044484
    %v1211 = vsel %vm1210, %v1200, %v1209
    %vm1212 = vcmask 1045509
    %v1213 = vsel %vm1212, %v1201, %v1211
    %vm1214 = vcmask 1046534
    %v1215 = vsel %vm1214, %v1202, %v1213
    %vm1216 = vcmask 1047559
    %v1217 = vsel %vm1216, %v1203, %v1215
    %vm1218 = vcmask 15360
    %v1220 = vsel %vm1218, %v1185, 0
    %v1222 = vsel %vm1218, %v1217, 0
    %1224 = vmatpush.xpose.msra.mxu0 0.0
    %1225 = vmatpush.xpose.msra.mxu0 0.0
    %1226 = vmatpush.xpose.msra.mxu0 0.0
    %1227 = vmatpush.xpose.msra.mxu0 0.0
    %1228 = vmatpush.xpose.msra.mxu0 0.0
    %1229 = vmatpush.xpose.msra.mxu0 0.0
    %1230 = vmatpush.xpose.msra.mxu0 0.0
    %1231 = vmatpush.xpose.msra.mxu0 0.0
    %1232 = vmatpush.xpose.msra.mxu0 0.0
    %1233 = vmatpush.xpose.msra.mxu0 0.0
    %1234 = vmatpush.xpose.msra.mxu0 0.0
    %1235 = vmatpush.xpose.msra.mxu0 0.0
    %1236 = vmatpush.xpose.msra.mxu0 0.0
    %1237 = vmatpush.xpose.msra.mxu0 0.0
    %1238 = vmatpush.xpose.msra.mxu0 0.0
    %1239 = vmatpush.xpose.msra.mxu0 %v1222
    %1240 = vmatmul.f32.gmra.mxu0 %v1220
    %v1241 = vpop.f32.mrf.mxu0
    %v1242 = vadd.f32 %v1187, %v1241
    %1243 = vdwg.mxu0
    %vm1244 = vcmask 58368
    %1245 = vst.msk [vmem:[#allocation12] sm:$0x3] %vm1244, %v1242
    // Predicated region
    $region42: #{tpu_custom_call.1} parent=1 // pred_check
      _
    $region43: #{tpu_custom_call.1} parent=1 // pred_check_branch
      %1247 = sbr.rel (0) target = $region45
    $region44: #{tpu_custom_call.1} parent=1 // pred_region
      %1249 = vsyncadd [#allocation8], 0
      %s1251 = sshll.u32 [#allocation12], 4
      %s1252 = int_to_ptr.vmem [resolvable:$true] %s1251
      %s1253 = sshll.u32 %s6, 4
      %s1254 = int_to_ptr.hbm [resolvable:$true] %s1253
      %1256 = dma.vmem_to_hbm [thread:$0]  %s1252, 32, %s1254, [#allocation8]
    $region45: #{tpu_custom_call.1} parent=1 // pred_fallthru
      _
    // Predicated region
    $region46: #{tpu_custom_call.1} parent=1 // pred_check
      _
    $region47: #{tpu_custom_call.1} parent=1 // pred_check_branch
      %1258 = sbr.rel (0) target = $region49
    $region48: #{tpu_custom_call.1} parent=1 // pred_region
      %1260 = dma.done [#allocation8], 32
    $region49: #{tpu_custom_call.1} parent=1 // pred_fallthru
      _
    %1261 = vsyncpa [#allocation7], 1
    %1262 = vsyncpa [#allocation10], 1
    %1263 = vsyncpa [#allocation8], 1

</llo_original>
